<compile_context>
chip_gen: v7x
topology: tpu7x:2x2x1
jax: 0.10.0
libtpu: 0.0.40
codegen_flags: <defaults>
</compile_context>

<pallas_src>
import functools
import math

import jax
import jax.numpy as jnp
from jax.experimental import pallas as pl
from jax.experimental.pallas import tpu as pltpu

_EPS = 1e-5


# ----------------------------------------------------------------------------
# Pallas kernel
# ----------------------------------------------------------------------------

def _instnorm_tanh(y, gamma, beta):
    """Per-row (== per (n, c)) instance norm over the lane (H*W) axis, affine, tanh."""
    mean = jnp.mean(y, axis=1, keepdims=True)
    var = jnp.mean((y - mean) ** 2, axis=1, keepdims=True)
    return jnp.tanh((y - mean) * jax.lax.rsqrt(var + _EPS) * gamma + beta)


def _sppf_kernel(x_ref, w0_ref, g0_ref, b0_ref, row_ref, w1_ref, g1_ref, b1_ref,
                 o_ref, *, width, hw):
    x = x_ref[0]                                                   # (C, HW) f32

    # conv0 (1x1, bias=False): bf16 MXU matmul, f32 accumulation, fused GN + tanh.
    y = jnp.dot(w0_ref[...], x.astype(jnp.bfloat16),
                preferred_element_type=jnp.float32)                # (C, HW) f32
    y = _instnorm_tanh(y, g0_ref[...], b0_ref[...])

    # ---- exact separable AvgPool2d(5, 1, padding=2, count_include_pad=True) ----
    # Zero-padded shifted taps are built with pltpu.roll.  For every static rotation
    # amount we also rotate a row-index map; it reports which source image row each
    # lane's value came from, so taps that crossed a row / image boundary (i.e. land
    # in the zero padding) are masked out.  Because the set of rotation amounts is
    # symmetric (+-d), the construction is independent of the hardware rotate
    # direction convention.  Requires H >= 5 (asserted in the wrapper).
    row = row_ref[...]                                             # (C, HW) f32 == h index
    shifts_w = (1, 2, hw - 1, hw - 2)                              # lane offsets +-1, +-2
    shifts_h = (width, 2 * width, hw - width, hw - 2 * width)      # row  offsets +-1, +-2
    masks_w = [jnp.abs(pltpu.roll(row, s, axis=1) - row) < 0.5 for s in shifts_w]
    masks_h = [jnp.abs(pltpu.roll(row, s, axis=1) - row) < 2.5 for s in shifts_h]

    def avgpool5(z):
        acc = z                                                     # center tap (W dir)
        for s, m in zip(shifts_w, masks_w):
            acc = acc + jnp.where(m, pltpu.roll(z, s, axis=1), 0.0)
        z = acc * 0.2
        acc = z                                                     # center tap (H dir)
        for s, m in zip(shifts_h, masks_h):
            acc = acc + jnp.where(m, pltpu.roll(z, s, axis=1), 0.0)
        return acc * 0.2

    o1 = avgpool5(y)
    o2 = avgpool5(o1)
    o3 = avgpool5(o2)

    # conv1 (1x1 over concat([y, o1, o2, o3])): concat folded into 4 small matmuls.
    feats = (y, o1, o2, o3)
    z = jnp.dot(w1_ref[0], feats[0].astype(jnp.bfloat16),
                preferred_element_type=jnp.float32)
    for k in range(1, 4):
        z = z + jnp.dot(w1_ref[k], feats[k].astype(jnp.bfloat16),
                        preferred_element_type=jnp.float32)

    o_ref[0] = _instnorm_tanh(z, g1_ref[...], b1_ref[...])


# ----------------------------------------------------------------------------
# Wrapper (single jit over the whole forward, exactly one pallas_call)
# ----------------------------------------------------------------------------

def _full_spec(shape):
    return pl.BlockSpec(shape, lambda i: (0,) * len(shape))


def sppf_mean_forward(params, x):
    n, c, h, w = x.shape
    hw = h * w
    assert h >= 5, "shift/mask separable pooling assumes H >= 5"

    x2 = x.reshape(n, c, hw).astype(jnp.float32)
    # Row-index map (value = image row of each flattened position), tiled over C.
    row_ids = jnp.broadcast_to(
        (jnp.arange(hw, dtype=jnp.int32) // w).astype(jnp.float32)[None, :], (c, hw))

    w0 = params['w0'].reshape(c, c).astype(jnp.bfloat16)
    # conv1 weight (C, 4C, 1, 1) -> (4, C, C):  w1r[k] == W1[:, k*C:(k+1)*C]
    w1r = params['w1'].reshape(c, 4, c).transpose(1, 0, 2).astype(jnp.bfloat16)
    g0 = params['g0'].reshape(c, 1).astype(jnp.float32)
    b0 = params['b0'].reshape(c, 1).astype(jnp.float32)
    g1 = params['g1'].reshape(c, 1).astype(jnp.float32)
    b1 = params['b1'].reshape(c, 1).astype(jnp.float32)

    flops = n * (2 * c * c * hw + 2 * c * (4 * c) * hw + 3 * 2 * 10 * c * hw
                 + 10 * c * hw)
    bytes_accessed = (4 * (2 * n * c * hw + c * hw) + 2 * (c * c + 4 * c * c)
                      + 4 * 4 * c)
    cost = pl.CostEstimate(flops=flops, transcendentals=n * (2 * c * hw + 2 * c),
                           bytes_accessed=bytes_accessed)

    out = pl.pallas_call(
        functools.partial(_sppf_kernel, width=w, hw=hw),
        out_shape=jax.ShapeDtypeStruct((n, c, hw), jnp.float32),
        grid=(n,),
        in_specs=[
            pl.BlockSpec((1, c, hw), lambda i: (i, 0, 0)),   # x  (one batch / step)
            _full_spec((c, c)),                              # conv0 weight (bf16)
            _full_spec((c, 1)),                              # gn0 gamma
            _full_spec((c, 1)),                              # gn0 beta
            _full_spec((c, hw)),                             # row-index map
            _full_spec((4, c, c)),                           # conv1 weight (split, bf16)
            _full_spec((c, 1)),                              # gn1 gamma
            _full_spec((c, 1)),                              # gn1 beta
        ],
        out_specs=pl.BlockSpec((1, c, hw), lambda i: (i, 0, 0)),
        compiler_params=pltpu.CompilerParams(
            dimension_semantics=("parallel",)),
        cost_estimate=cost,
    )(x2, w0, g0, b0, row_ids, w1r, g1, b1)
    return out.reshape(n, c, h, w)


sppf_mean = jax.jit(sppf_mean_forward)


# ----------------------------------------------------------------------------
# Pure-JAX reference (independent path: einsum conv + lax.reduce_window pooling)
# ----------------------------------------------------------------------------

def _conv_gn_tanh_ref(x, w, gamma, beta):
    co = w.shape[0]
    y = jnp.einsum('oc,nchw->nohw', w.reshape(co, -1), x)
    mean = jnp.mean(y, axis=(2, 3), keepdims=True)
    var = jnp.mean((y - mean) ** 2, axis=(2, 3), keepdims=True)
    yn = (y - mean) * jax.lax.rsqrt(var + _EPS)
    return jnp.tanh(yn * gamma[None, :, None, None] + beta[None, :, None, None])


def _avgpool5_ref(x):
    s = jax.lax.reduce_window(x, 0.0, jax.lax.add,
                              window_dimensions=(1, 1, 5, 5),
                              window_strides=(1, 1, 1, 1),
                              padding=((0, 0), (0, 0), (2, 2), (2, 2)))
    return s / 25.0


@jax.jit
def sppf_mean_reference(params, x):
    y = _conv_gn_tanh_ref(x, params['w0'], params['g0'], params['b0'])
    o1 = _avgpool5_ref(y)
    o2 = _avgpool5_ref(o1)
    o3 = _avgpool5_ref(o2)
    cat = jnp.concatenate([y, o1, o2, o3], axis=1)
    return _conv_gn_tanh_ref(cat, params['w1'], params['g1'], params['b1'])


# ----------------------------------------------------------------------------

if __name__ == "__main__":
    N, C, H, W = 2, 8, 16, 16
    key = jax.random.PRNGKey(0)
    kx, k0, k1, kg0, kb0, kg1, kb1 = jax.random.split(key, 7)

    params = {
        'w0': jax.random.normal(k0, (C, C, 1, 1), jnp.float32) / math.sqrt(C),
        'g0': 1.0 + 0.1 * jax.random.normal(kg0, (C,), jnp.float32),
        'b0': 0.05 * jax.random.normal(kb0, (C,), jnp.float32),
        'w1': jax.random.normal(k1, (C, 4 * C, 1, 1), jnp.float32) / math.sqrt(4 * C),
        'g1': 1.0 + 0.1 * jax.random.normal(kg1, (C,), jnp.float32),
        'b1': 0.05 * jax.random.normal(kb1, (C,), jnp.float32),
    }
    x = jax.random.normal(kx, (N, C, H, W), jnp.float32)

    out = jax.block_until_ready(sppf_mean(params, x))
    assert out.shape == (N, C, H, W), out.shape
    assert out.dtype == jnp.float32
    assert bool(jnp.all(jnp.isfinite(out)))

    ref = jax.block_until_ready(sppf_mean_reference(params, x))
    err = float(jnp.max(jnp.abs(out - ref)))
    assert err < 0.1, f"max abs err vs reference: {err}"

    print("KERNEL_OK")
</pallas_src>

<mosaic_0001>
module attributes {stable_mosaic.version = 11 : i64} {
  func.func @_sppf_kernel(%arg0: i32, %arg1: memref<1x8x256xf32, #tpu.memory_space<vmem>>, %arg2: memref<8x8xbf16, #tpu.memory_space<vmem>>, %arg3: memref<8x1xf32, #tpu.memory_space<vmem>>, %arg4: memref<8x1xf32, #tpu.memory_space<vmem>>, %arg5: memref<8x256xf32, #tpu.memory_space<vmem>>, %arg6: memref<4x8x8xbf16, #tpu.memory_space<vmem>>, %arg7: memref<8x1xf32, #tpu.memory_space<vmem>>, %arg8: memref<8x1xf32, #tpu.memory_space<vmem>>, %arg9: memref<1x8x256xf32, #tpu.memory_space<vmem>>) attributes {dimension_semantics = [#tpu.dimension_semantics<parallel>], iteration_bounds = array<i64: 2>, scalar_prefetch = 0 : i64, scratch_operands = 0 : i64, tpu.core_type = #tpu.core_type<tc>, window_params = [{transform_indices = @transform_0, window_bounds = array<i64: 1, 8, 256>}, {pipeline_mode = #tpu.pipeline_mode<synchronous>, transform_indices = @transform_1, window_bounds = array<i64: 8, 8>}, {pipeline_mode = #tpu.pipeline_mode<synchronous>, transform_indices = @transform_2, window_bounds = array<i64: 8, 1>}, {pipeline_mode = #tpu.pipeline_mode<synchronous>, transform_indices = @transform_3, window_bounds = array<i64: 8, 1>}, {pipeline_mode = #tpu.pipeline_mode<synchronous>, transform_indices = @transform_4, window_bounds = array<i64: 8, 256>}, {pipeline_mode = #tpu.pipeline_mode<synchronous>, transform_indices = @transform_5, window_bounds = array<i64: 4, 8, 8>}, {pipeline_mode = #tpu.pipeline_mode<synchronous>, transform_indices = @transform_6, window_bounds = array<i64: 8, 1>}, {pipeline_mode = #tpu.pipeline_mode<synchronous>, transform_indices = @transform_7, window_bounds = array<i64: 8, 1>}, {transform_indices = @transform_8, window_bounds = array<i64: 1, 8, 256>}]} {
    %c0 = arith.constant 0 : index
    %c0_0 = arith.constant 0 : index
    %c0_1 = arith.constant 0 : index
    %0 = vector.load %arg1[%c0, %c0_0, %c0_1] : memref<1x8x256xf32, #tpu.memory_space<vmem>>, vector<1x8x256xf32>
    %1 = vector.shape_cast %0 : vector<1x8x256xf32> to vector<8x256xf32>
    %c0_2 = arith.constant 0 : index
    %c0_3 = arith.constant 0 : index
    %2 = vector.load %arg2[%c0_2, %c0_3] : memref<8x8xbf16, #tpu.memory_space<vmem>>, vector<8x8xbf16>
    %3 = arith.truncf %1 : vector<8x256xf32> to vector<8x256xbf16>
    %cst = arith.constant dense<0.000000e+00> : vector<8x256xf32>
    %4 = tpu.matmul %2, %3, %cst {dimension_numbers = #tpu.dot_dimension_numbers<[1], [0], [0], [1], [0, 0, 1, 1], [], []>} : vector<8x8xbf16>, vector<8x256xbf16>, vector<8x256xf32> -> vector<8x256xf32>
    %c0_4 = arith.constant 0 : index
    %c0_5 = arith.constant 0 : index
    %5 = vector.load %arg3[%c0_4, %c0_5] : memref<8x1xf32, #tpu.memory_space<vmem>>, vector<8x1xf32>
    %c0_6 = arith.constant 0 : index
    %c0_7 = arith.constant 0 : index
    %6 = vector.load %arg4[%c0_6, %c0_7] : memref<8x1xf32, #tpu.memory_space<vmem>>, vector<8x1xf32>
    %cst_8 = arith.constant dense<0.000000e+00> : vector<8xf32>
    %7 = vector.multi_reduction <add>, %4, %cst_8 [1] : vector<8x256xf32> to vector<8xf32>
    %8 = vector.shape_cast %7 : vector<8xf32> to vector<8x1xf32>
    %cst_9 = arith.constant 2.560000e+02 : f32
    %9 = vector.broadcast %cst_9 : f32 to vector<8x1xf32>
    %10 = arith.divf %8, %9 : vector<8x1xf32>
    %11 = vector.broadcast %10 : vector<8x1xf32> to vector<8x256xf32>
    %12 = arith.subf %4, %11 : vector<8x256xf32>
    %13 = arith.mulf %12, %12 : vector<8x256xf32>
    %cst_10 = arith.constant dense<0.000000e+00> : vector<8xf32>
    %14 = vector.multi_reduction <add>, %13, %cst_10 [1] : vector<8x256xf32> to vector<8xf32>
    %15 = vector.shape_cast %14 : vector<8xf32> to vector<8x1xf32>
    %cst_11 = arith.constant 2.560000e+02 : f32
    %16 = vector.broadcast %cst_11 : f32 to vector<8x1xf32>
    %17 = arith.divf %15, %16 : vector<8x1xf32>
    %18 = vector.broadcast %10 : vector<8x1xf32> to vector<8x256xf32>
    %19 = arith.subf %4, %18 : vector<8x256xf32>
    %cst_12 = arith.constant 9.99999974E-6 : f32
    %20 = vector.broadcast %cst_12 : f32 to vector<8x1xf32>
    %21 = arith.addf %17, %20 : vector<8x1xf32>
    %22 = math.rsqrt %21 : vector<8x1xf32>
    %23 = vector.broadcast %22 : vector<8x1xf32> to vector<8x256xf32>
    %24 = arith.mulf %19, %23 : vector<8x256xf32>
    %25 = vector.broadcast %5 : vector<8x1xf32> to vector<8x256xf32>
    %26 = arith.mulf %24, %25 : vector<8x256xf32>
    %27 = vector.broadcast %6 : vector<8x1xf32> to vector<8x256xf32>
    %28 = arith.addf %26, %27 : vector<8x256xf32>
    %29 = math.tanh %28 : vector<8x256xf32>
    %c0_13 = arith.constant 0 : index
    %c0_14 = arith.constant 0 : index
    %30 = vector.load %arg5[%c0_13, %c0_14] : memref<8x256xf32, #tpu.memory_space<vmem>>, vector<8x256xf32>
    %c1_i32 = arith.constant 1 : i32
    %31 = tpu.dynamic_rotate %30 by %c1_i32 dim 1 : vector<8x256xf32>, i32 -> vector<8x256xf32>
    %32 = arith.subf %31, %30 : vector<8x256xf32>
    %33 = math.absf %32 : vector<8x256xf32>
    %cst_15 = arith.constant 5.000000e-01 : f32
    %34 = vector.broadcast %cst_15 : f32 to vector<8x256xf32>
    %35 = arith.cmpf olt, %33, %34 : vector<8x256xf32>
    %c2_i32 = arith.constant 2 : i32
    %36 = tpu.dynamic_rotate %30 by %c2_i32 dim 1 : vector<8x256xf32>, i32 -> vector<8x256xf32>
    %37 = arith.subf %36, %30 : vector<8x256xf32>
    %38 = math.absf %37 : vector<8x256xf32>
    %cst_16 = arith.constant 5.000000e-01 : f32
    %39 = vector.broadcast %cst_16 : f32 to vector<8x256xf32>
    %40 = arith.cmpf olt, %38, %39 : vector<8x256xf32>
    %c255_i32 = arith.constant 255 : i32
    %41 = tpu.dynamic_rotate %30 by %c255_i32 dim 1 : vector<8x256xf32>, i32 -> vector<8x256xf32>
    %42 = arith.subf %41, %30 : vector<8x256xf32>
    %43 = math.absf %42 : vector<8x256xf32>
    %cst_17 = arith.constant 5.000000e-01 : f32
    %44 = vector.broadcast %cst_17 : f32 to vector<8x256xf32>
    %45 = arith.cmpf olt, %43, %44 : vector<8x256xf32>
    %c254_i32 = arith.constant 254 : i32
    %46 = tpu.dynamic_rotate %30 by %c254_i32 dim 1 : vector<8x256xf32>, i32 -> vector<8x256xf32>
    %47 = arith.subf %46, %30 : vector<8x256xf32>
    %48 = math.absf %47 : vector<8x256xf32>
    %cst_18 = arith.constant 5.000000e-01 : f32
    %49 = vector.broadcast %cst_18 : f32 to vector<8x256xf32>
    %50 = arith.cmpf olt, %48, %49 : vector<8x256xf32>
    %c16_i32 = arith.constant 16 : i32
    %51 = tpu.dynamic_rotate %30 by %c16_i32 dim 1 : vector<8x256xf32>, i32 -> vector<8x256xf32>
    %52 = arith.subf %51, %30 : vector<8x256xf32>
    %53 = math.absf %52 : vector<8x256xf32>
    %cst_19 = arith.constant 2.500000e+00 : f32
    %54 = vector.broadcast %cst_19 : f32 to vector<8x256xf32>
    %55 = arith.cmpf olt, %53, %54 : vector<8x256xf32>
    %c32_i32 = arith.constant 32 : i32
    %56 = tpu.dynamic_rotate %30 by %c32_i32 dim 1 : vector<8x256xf32>, i32 -> vector<8x256xf32>
    %57 = arith.subf %56, %30 : vector<8x256xf32>
    %58 = math.absf %57 : vector<8x256xf32>
    %cst_20 = arith.constant 2.500000e+00 : f32
    %59 = vector.broadcast %cst_20 : f32 to vector<8x256xf32>
    %60 = arith.cmpf olt, %58, %59 : vector<8x256xf32>
    %c240_i32 = arith.constant 240 : i32
    %61 = tpu.dynamic_rotate %30 by %c240_i32 dim 1 : vector<8x256xf32>, i32 -> vector<8x256xf32>
    %62 = arith.subf %61, %30 : vector<8x256xf32>
    %63 = math.absf %62 : vector<8x256xf32>
    %cst_21 = arith.constant 2.500000e+00 : f32
    %64 = vector.broadcast %cst_21 : f32 to vector<8x256xf32>
    %65 = arith.cmpf olt, %63, %64 : vector<8x256xf32>
    %c224_i32 = arith.constant 224 : i32
    %66 = tpu.dynamic_rotate %30 by %c224_i32 dim 1 : vector<8x256xf32>, i32 -> vector<8x256xf32>
    %67 = arith.subf %66, %30 : vector<8x256xf32>
    %68 = math.absf %67 : vector<8x256xf32>
    %cst_22 = arith.constant 2.500000e+00 : f32
    %69 = vector.broadcast %cst_22 : f32 to vector<8x256xf32>
    %70 = arith.cmpf olt, %68, %69 : vector<8x256xf32>
    %c1_i32_23 = arith.constant 1 : i32
    %71 = tpu.dynamic_rotate %29 by %c1_i32_23 dim 1 : vector<8x256xf32>, i32 -> vector<8x256xf32>
    %cst_24 = arith.constant 0.000000e+00 : f32
    %72 = vector.broadcast %cst_24 : f32 to vector<8x256xf32>
    %73 = arith.select %35, %71, %72 : vector<8x256xi1>, vector<8x256xf32>
    %74 = arith.addf %29, %73 : vector<8x256xf32>
    %c2_i32_25 = arith.constant 2 : i32
    %75 = tpu.dynamic_rotate %29 by %c2_i32_25 dim 1 : vector<8x256xf32>, i32 -> vector<8x256xf32>
    %cst_26 = arith.constant 0.000000e+00 : f32
    %76 = vector.broadcast %cst_26 : f32 to vector<8x256xf32>
    %77 = arith.select %40, %75, %76 : vector<8x256xi1>, vector<8x256xf32>
    %78 = arith.addf %74, %77 : vector<8x256xf32>
    %c255_i32_27 = arith.constant 255 : i32
    %79 = tpu.dynamic_rotate %29 by %c255_i32_27 dim 1 : vector<8x256xf32>, i32 -> vector<8x256xf32>
    %cst_28 = arith.constant 0.000000e+00 : f32
    %80 = vector.broadcast %cst_28 : f32 to vector<8x256xf32>
    %81 = arith.select %45, %79, %80 : vector<8x256xi1>, vector<8x256xf32>
    %82 = arith.addf %78, %81 : vector<8x256xf32>
    %c254_i32_29 = arith.constant 254 : i32
    %83 = tpu.dynamic_rotate %29 by %c254_i32_29 dim 1 : vector<8x256xf32>, i32 -> vector<8x256xf32>
    %cst_30 = arith.constant 0.000000e+00 : f32
    %84 = vector.broadcast %cst_30 : f32 to vector<8x256xf32>
    %85 = arith.select %50, %83, %84 : vector<8x256xi1>, vector<8x256xf32>
    %86 = arith.addf %82, %85 : vector<8x256xf32>
    %cst_31 = arith.constant 2.000000e-01 : f32
    %87 = vector.broadcast %cst_31 : f32 to vector<8x256xf32>
    %88 = arith.mulf %86, %87 : vector<8x256xf32>
    %c16_i32_32 = arith.constant 16 : i32
    %89 = tpu.dynamic_rotate %88 by %c16_i32_32 dim 1 : vector<8x256xf32>, i32 -> vector<8x256xf32>
    %cst_33 = arith.constant 0.000000e+00 : f32
    %90 = vector.broadcast %cst_33 : f32 to vector<8x256xf32>
    %91 = arith.select %55, %89, %90 : vector<8x256xi1>, vector<8x256xf32>
    %92 = arith.addf %88, %91 : vector<8x256xf32>
    %c32_i32_34 = arith.constant 32 : i32
    %93 = tpu.dynamic_rotate %88 by %c32_i32_34 dim 1 : vector<8x256xf32>, i32 -> vector<8x256xf32>
    %cst_35 = arith.constant 0.000000e+00 : f32
    %94 = vector.broadcast %cst_35 : f32 to vector<8x256xf32>
    %95 = arith.select %60, %93, %94 : vector<8x256xi1>, vector<8x256xf32>
    %96 = arith.addf %92, %95 : vector<8x256xf32>
    %c240_i32_36 = arith.constant 240 : i32
    %97 = tpu.dynamic_rotate %88 by %c240_i32_36 dim 1 : vector<8x256xf32>, i32 -> vector<8x256xf32>
    %cst_37 = arith.constant 0.000000e+00 : f32
    %98 = vector.broadcast %cst_37 : f32 to vector<8x256xf32>
    %99 = arith.select %65, %97, %98 : vector<8x256xi1>, vector<8x256xf32>
    %100 = arith.addf %96, %99 : vector<8x256xf32>
    %c224_i32_38 = arith.constant 224 : i32
    %101 = tpu.dynamic_rotate %88 by %c224_i32_38 dim 1 : vector<8x256xf32>, i32 -> vector<8x256xf32>
    %cst_39 = arith.constant 0.000000e+00 : f32
    %102 = vector.broadcast %cst_39 : f32 to vector<8x256xf32>
    %103 = arith.select %70, %101, %102 : vector<8x256xi1>, vector<8x256xf32>
    %104 = arith.addf %100, %103 : vector<8x256xf32>
    %cst_40 = arith.constant 2.000000e-01 : f32
    %105 = vector.broadcast %cst_40 : f32 to vector<8x256xf32>
    %106 = arith.mulf %104, %105 : vector<8x256xf32>
    %c1_i32_41 = arith.constant 1 : i32
    %107 = tpu.dynamic_rotate %106 by %c1_i32_41 dim 1 : vector<8x256xf32>, i32 -> vector<8x256xf32>
    %cst_42 = arith.constant 0.000000e+00 : f32
    %108 = vector.broadcast %cst_42 : f32 to vector<8x256xf32>
    %109 = arith.select %35, %107, %108 : vector<8x256xi1>, vector<8x256xf32>
    %110 = arith.addf %106, %109 : vector<8x256xf32>
    %c2_i32_43 = arith.constant 2 : i32
    %111 = tpu.dynamic_rotate %106 by %c2_i32_43 dim 1 : vector<8x256xf32>, i32 -> vector<8x256xf32>
    %cst_44 = arith.constant 0.000000e+00 : f32
    %112 = vector.broadcast %cst_44 : f32 to vector<8x256xf32>
    %113 = arith.select %40, %111, %112 : vector<8x256xi1>, vector<8x256xf32>
    %114 = arith.addf %110, %113 : vector<8x256xf32>
    %c255_i32_45 = arith.constant 255 : i32
    %115 = tpu.dynamic_rotate %106 by %c255_i32_45 dim 1 : vector<8x256xf32>, i32 -> vector<8x256xf32>
    %cst_46 = arith.constant 0.000000e+00 : f32
    %116 = vector.broadcast %cst_46 : f32 to vector<8x256xf32>
    %117 = arith.select %45, %115, %116 : vector<8x256xi1>, vector<8x256xf32>
    %118 = arith.addf %114, %117 : vector<8x256xf32>
    %c254_i32_47 = arith.constant 254 : i32
    %119 = tpu.dynamic_rotate %106 by %c254_i32_47 dim 1 : vector<8x256xf32>, i32 -> vector<8x256xf32>
    %cst_48 = arith.constant 0.000000e+00 : f32
    %120 = vector.broadcast %cst_48 : f32 to vector<8x256xf32>
    %121 = arith.select %50, %119, %120 : vector<8x256xi1>, vector<8x256xf32>
    %122 = arith.addf %118, %121 : vector<8x256xf32>
    %cst_49 = arith.constant 2.000000e-01 : f32
    %123 = vector.broadcast %cst_49 : f32 to vector<8x256xf32>
    %124 = arith.mulf %122, %123 : vector<8x256xf32>
    %c16_i32_50 = arith.constant 16 : i32
    %125 = tpu.dynamic_rotate %124 by %c16_i32_50 dim 1 : vector<8x256xf32>, i32 -> vector<8x256xf32>
    %cst_51 = arith.constant 0.000000e+00 : f32
    %126 = vector.broadcast %cst_51 : f32 to vector<8x256xf32>
    %127 = arith.select %55, %125, %126 : vector<8x256xi1>, vector<8x256xf32>
    %128 = arith.addf %124, %127 : vector<8x256xf32>
    %c32_i32_52 = arith.constant 32 : i32
    %129 = tpu.dynamic_rotate %124 by %c32_i32_52 dim 1 : vector<8x256xf32>, i32 -> vector<8x256xf32>
    %cst_53 = arith.constant 0.000000e+00 : f32
    %130 = vector.broadcast %cst_53 : f32 to vector<8x256xf32>
    %131 = arith.select %60, %129, %130 : vector<8x256xi1>, vector<8x256xf32>
    %132 = arith.addf %128, %131 : vector<8x256xf32>
    %c240_i32_54 = arith.constant 240 : i32
    %133 = tpu.dynamic_rotate %124 by %c240_i32_54 dim 1 : vector<8x256xf32>, i32 -> vector<8x256xf32>
    %cst_55 = arith.constant 0.000000e+00 : f32
    %134 = vector.broadcast %cst_55 : f32 to vector<8x256xf32>
    %135 = arith.select %65, %133, %134 : vector<8x256xi1>, vector<8x256xf32>
    %136 = arith.addf %132, %135 : vector<8x256xf32>
    %c224_i32_56 = arith.constant 224 : i32
    %137 = tpu.dynamic_rotate %124 by %c224_i32_56 dim 1 : vector<8x256xf32>, i32 -> vector<8x256xf32>
    %cst_57 = arith.constant 0.000000e+00 : f32
    %138 = vector.broadcast %cst_57 : f32 to vector<8x256xf32>
    %139 = arith.select %70, %137, %138 : vector<8x256xi1>, vector<8x256xf32>
    %140 = arith.addf %136, %139 : vector<8x256xf32>
    %cst_58 = arith.constant 2.000000e-01 : f32
    %141 = vector.broadcast %cst_58 : f32 to vector<8x256xf32>
    %142 = arith.mulf %140, %141 : vector<8x256xf32>
    %c1_i32_59 = arith.constant 1 : i32
    %143 = tpu.dynamic_rotate %142 by %c1_i32_59 dim 1 : vector<8x256xf32>, i32 -> vector<8x256xf32>
    %cst_60 = arith.constant 0.000000e+00 : f32
    %144 = vector.broadcast %cst_60 : f32 to vector<8x256xf32>
    %145 = arith.select %35, %143, %144 : vector<8x256xi1>, vector<8x256xf32>
    %146 = arith.addf %142, %145 : vector<8x256xf32>
    %c2_i32_61 = arith.constant 2 : i32
    %147 = tpu.dynamic_rotate %142 by %c2_i32_61 dim 1 : vector<8x256xf32>, i32 -> vector<8x256xf32>
    %cst_62 = arith.constant 0.000000e+00 : f32
    %148 = vector.broadcast %cst_62 : f32 to vector<8x256xf32>
    %149 = arith.select %40, %147, %148 : vector<8x256xi1>, vector<8x256xf32>
    %150 = arith.addf %146, %149 : vector<8x256xf32>
    %c255_i32_63 = arith.constant 255 : i32
    %151 = tpu.dynamic_rotate %142 by %c255_i32_63 dim 1 : vector<8x256xf32>, i32 -> vector<8x256xf32>
    %cst_64 = arith.constant 0.000000e+00 : f32
    %152 = vector.broadcast %cst_64 : f32 to vector<8x256xf32>
    %153 = arith.select %45, %151, %152 : vector<8x256xi1>, vector<8x256xf32>
    %154 = arith.addf %150, %153 : vector<8x256xf32>
    %c254_i32_65 = arith.constant 254 : i32
    %155 = tpu.dynamic_rotate %142 by %c254_i32_65 dim 1 : vector<8x256xf32>, i32 -> vector<8x256xf32>
    %cst_66 = arith.constant 0.000000e+00 : f32
    %156 = vector.broadcast %cst_66 : f32 to vector<8x256xf32>
    %157 = arith.select %50, %155, %156 : vector<8x256xi1>, vector<8x256xf32>
    %158 = arith.addf %154, %157 : vector<8x256xf32>
    %cst_67 = arith.constant 2.000000e-01 : f32
    %159 = vector.broadcast %cst_67 : f32 to vector<8x256xf32>
    %160 = arith.mulf %158, %159 : vector<8x256xf32>
    %c16_i32_68 = arith.constant 16 : i32
    %161 = tpu.dynamic_rotate %160 by %c16_i32_68 dim 1 : vector<8x256xf32>, i32 -> vector<8x256xf32>
    %cst_69 = arith.constant 0.000000e+00 : f32
    %162 = vector.broadcast %cst_69 : f32 to vector<8x256xf32>
    %163 = arith.select %55, %161, %162 : vector<8x256xi1>, vector<8x256xf32>
    %164 = arith.addf %160, %163 : vector<8x256xf32>
    %c32_i32_70 = arith.constant 32 : i32
    %165 = tpu.dynamic_rotate %160 by %c32_i32_70 dim 1 : vector<8x256xf32>, i32 -> vector<8x256xf32>
    %cst_71 = arith.constant 0.000000e+00 : f32
    %166 = vector.broadcast %cst_71 : f32 to vector<8x256xf32>
    %167 = arith.select %60, %165, %166 : vector<8x256xi1>, vector<8x256xf32>
    %168 = arith.addf %164, %167 : vector<8x256xf32>
    %c240_i32_72 = arith.constant 240 : i32
    %169 = tpu.dynamic_rotate %160 by %c240_i32_72 dim 1 : vector<8x256xf32>, i32 -> vector<8x256xf32>
    %cst_73 = arith.constant 0.000000e+00 : f32
    %170 = vector.broadcast %cst_73 : f32 to vector<8x256xf32>
    %171 = arith.select %65, %169, %170 : vector<8x256xi1>, vector<8x256xf32>
    %172 = arith.addf %168, %171 : vector<8x256xf32>
    %c224_i32_74 = arith.constant 224 : i32
    %173 = tpu.dynamic_rotate %160 by %c224_i32_74 dim 1 : vector<8x256xf32>, i32 -> vector<8x256xf32>
    %cst_75 = arith.constant 0.000000e+00 : f32
    %174 = vector.broadcast %cst_75 : f32 to vector<8x256xf32>
    %175 = arith.select %70, %173, %174 : vector<8x256xi1>, vector<8x256xf32>
    %176 = arith.addf %172, %175 : vector<8x256xf32>
    %cst_76 = arith.constant 2.000000e-01 : f32
    %177 = vector.broadcast %cst_76 : f32 to vector<8x256xf32>
    %178 = arith.mulf %176, %177 : vector<8x256xf32>
    %c0_77 = arith.constant 0 : index
    %c0_78 = arith.constant 0 : index
    %c0_79 = arith.constant 0 : index
    %179 = vector.load %arg6[%c0_77, %c0_78, %c0_79] : memref<4x8x8xbf16, #tpu.memory_space<vmem>>, vector<1x8x8xbf16>
    %180 = vector.shape_cast %179 : vector<1x8x8xbf16> to vector<8x8xbf16>
    %181 = arith.truncf %29 : vector<8x256xf32> to vector<8x256xbf16>
    %cst_80 = arith.constant dense<0.000000e+00> : vector<8x256xf32>
    %182 = tpu.matmul %180, %181, %cst_80 {dimension_numbers = #tpu.dot_dimension_numbers<[1], [0], [0], [1], [0, 0, 1, 1], [], []>} : vector<8x8xbf16>, vector<8x256xbf16>, vector<8x256xf32> -> vector<8x256xf32>
    %c1 = arith.constant 1 : index
    %c0_81 = arith.constant 0 : index
    %c0_82 = arith.constant 0 : index
    %183 = vector.load %arg6[%c1, %c0_81, %c0_82] : memref<4x8x8xbf16, #tpu.memory_space<vmem>>, vector<1x8x8xbf16>
    %184 = vector.shape_cast %183 : vector<1x8x8xbf16> to vector<8x8xbf16>
    %185 = arith.truncf %106 : vector<8x256xf32> to vector<8x256xbf16>
    %cst_83 = arith.constant dense<0.000000e+00> : vector<8x256xf32>
    %186 = tpu.matmul %184, %185, %cst_83 {dimension_numbers = #tpu.dot_dimension_numbers<[1], [0], [0], [1], [0, 0, 1, 1], [], []>} : vector<8x8xbf16>, vector<8x256xbf16>, vector<8x256xf32> -> vector<8x256xf32>
    %187 = arith.addf %182, %186 : vector<8x256xf32>
    %c2 = arith.constant 2 : index
    %c0_84 = arith.constant 0 : index
    %c0_85 = arith.constant 0 : index
    %188 = vector.load %arg6[%c2, %c0_84, %c0_85] : memref<4x8x8xbf16, #tpu.memory_space<vmem>>, vector<1x8x8xbf16>
    %189 = vector.shape_cast %188 : vector<1x8x8xbf16> to vector<8x8xbf16>
    %190 = arith.truncf %142 : vector<8x256xf32> to vector<8x256xbf16>
    %cst_86 = arith.constant dense<0.000000e+00> : vector<8x256xf32>
    %191 = tpu.matmul %189, %190, %cst_86 {dimension_numbers = #tpu.dot_dimension_numbers<[1], [0], [0], [1], [0, 0, 1, 1], [], []>} : vector<8x8xbf16>, vector<8x256xbf16>, vector<8x256xf32> -> vector<8x256xf32>
    %192 = arith.addf %187, %191 : vector<8x256xf32>
    %c3 = arith.constant 3 : index
    %c0_87 = arith.constant 0 : index
    %c0_88 = arith.constant 0 : index
    %193 = vector.load %arg6[%c3, %c0_87, %c0_88] : memref<4x8x8xbf16, #tpu.memory_space<vmem>>, vector<1x8x8xbf16>
    %194 = vector.shape_cast %193 : vector<1x8x8xbf16> to vector<8x8xbf16>
    %195 = arith.truncf %178 : vector<8x256xf32> to vector<8x256xbf16>
    %cst_89 = arith.constant dense<0.000000e+00> : vector<8x256xf32>
    %196 = tpu.matmul %194, %195, %cst_89 {dimension_numbers = #tpu.dot_dimension_numbers<[1], [0], [0], [1], [0, 0, 1, 1], [], []>} : vector<8x8xbf16>, vector<8x256xbf16>, vector<8x256xf32> -> vector<8x256xf32>
    %197 = arith.addf %192, %196 : vector<8x256xf32>
    %c0_90 = arith.constant 0 : index
    %c0_91 = arith.constant 0 : index
    %198 = vector.load %arg7[%c0_90, %c0_91] : memref<8x1xf32, #tpu.memory_space<vmem>>, vector<8x1xf32>
    %c0_92 = arith.constant 0 : index
    %c0_93 = arith.constant 0 : index
    %199 = vector.load %arg8[%c0_92, %c0_93] : memref<8x1xf32, #tpu.memory_space<vmem>>, vector<8x1xf32>
    %cst_94 = arith.constant dense<0.000000e+00> : vector<8xf32>
    %200 = vector.multi_reduction <add>, %197, %cst_94 [1] : vector<8x256xf32> to vector<8xf32>
    %201 = vector.shape_cast %200 : vector<8xf32> to vector<8x1xf32>
    %cst_95 = arith.constant 2.560000e+02 : f32
    %202 = vector.broadcast %cst_95 : f32 to vector<8x1xf32>
    %203 = arith.divf %201, %202 : vector<8x1xf32>
    %204 = vector.broadcast %203 : vector<8x1xf32> to vector<8x256xf32>
    %205 = arith.subf %197, %204 : vector<8x256xf32>
    %206 = arith.mulf %205, %205 : vector<8x256xf32>
    %cst_96 = arith.constant dense<0.000000e+00> : vector<8xf32>
    %207 = vector.multi_reduction <add>, %206, %cst_96 [1] : vector<8x256xf32> to vector<8xf32>
    %208 = vector.shape_cast %207 : vector<8xf32> to vector<8x1xf32>
    %cst_97 = arith.constant 2.560000e+02 : f32
    %209 = vector.broadcast %cst_97 : f32 to vector<8x1xf32>
    %210 = arith.divf %208, %209 : vector<8x1xf32>
    %211 = vector.broadcast %203 : vector<8x1xf32> to vector<8x256xf32>
    %212 = arith.subf %197, %211 : vector<8x256xf32>
    %cst_98 = arith.constant 9.99999974E-6 : f32
    %213 = vector.broadcast %cst_98 : f32 to vector<8x1xf32>
    %214 = arith.addf %210, %213 : vector<8x1xf32>
    %215 = math.rsqrt %214 : vector<8x1xf32>
    %216 = vector.broadcast %215 : vector<8x1xf32> to vector<8x256xf32>
    %217 = arith.mulf %212, %216 : vector<8x256xf32>
    %218 = vector.broadcast %198 : vector<8x1xf32> to vector<8x256xf32>
    %219 = arith.mulf %217, %218 : vector<8x256xf32>
    %220 = vector.broadcast %199 : vector<8x1xf32> to vector<8x256xf32>
    %221 = arith.addf %219, %220 : vector<8x256xf32>
    %222 = math.tanh %221 : vector<8x256xf32>
    %c0_99 = arith.constant 0 : index
    %c0_100 = arith.constant 0 : index
    %c0_101 = arith.constant 0 : index
    %223 = vector.load %arg9[%c0_99, %c0_100, %c0_101] : memref<1x8x256xf32, #tpu.memory_space<vmem>>, vector<1x8x256xf32>
    %224 = vector.shape_cast %223 : vector<1x8x256xf32> to vector<8x256xf32>
    %225 = vector.shape_cast %222 : vector<8x256xf32> to vector<1x8x256xf32>
    tpu.vector_store %arg9[%c0_99, %c0_100, %c0_101], %225 {strides = array<i32>} : memref<1x8x256xf32, #tpu.memory_space<vmem>>, vector<1x8x256xf32>,
    return
  }
  func.func @transform_0(%arg0: i32) -> (i32, i32, i32) {
    %c0_i32 = arith.constant 0 : i32
    %c0_i32_0 = arith.constant 0 : i32
    %c0_i32_1 = arith.constant 0 : i32
    return %arg0, %c0_i32, %c0_i32_0 : i32, i32, i32
  }
  func.func @transform_1(%arg0: i32) -> (i32, i32) {
    %c0_i32 = arith.constant 0 : i32
    %c0_i32_0 = arith.constant 0 : i32
    %c0_i32_1 = arith.constant 0 : i32
    return %c0_i32, %c0_i32_0 : i32, i32
  }
  func.func @transform_2(%arg0: i32) -> (i32, i32) {
    %c0_i32 = arith.constant 0 : i32
    %c0_i32_0 = arith.constant 0 : i32
    %c0_i32_1 = arith.constant 0 : i32
    return %c0_i32, %c0_i32_0 : i32, i32
  }
  func.func @transform_3(%arg0: i32) -> (i32, i32) {
    %c0_i32 = arith.constant 0 : i32
    %c0_i32_0 = arith.constant 0 : i32
    %c0_i32_1 = arith.constant 0 : i32
    return %c0_i32, %c0_i32_0 : i32, i32
  }
  func.func @transform_4(%arg0: i32) -> (i32, i32) {
    %c0_i32 = arith.constant 0 : i32
    %c0_i32_0 = arith.constant 0 : i32
    %c0_i32_1 = arith.constant 0 : i32
    return %c0_i32, %c0_i32_0 : i32, i32
  }
  func.func @transform_5(%arg0: i32) -> (i32, i32, i32) {
    %c0_i32 = arith.constant 0 : i32
    %c0_i32_0 = arith.constant 0 : i32
    %c0_i32_1 = arith.constant 0 : i32
    %c0_i32_2 = arith.constant 0 : i32
    return %c0_i32, %c0_i32_0, %c0_i32_1 : i32, i32, i32
  }
  func.func @transform_6(%arg0: i32) -> (i32, i32) {
    %c0_i32 = arith.constant 0 : i32
    %c0_i32_0 = arith.constant 0 : i32
    %c0_i32_1 = arith.constant 0 : i32
    return %c0_i32, %c0_i32_0 : i32, i32
  }
  func.func @transform_7(%arg0: i32) -> (i32, i32) {
    %c0_i32 = arith.constant 0 : i32
    %c0_i32_0 = arith.constant 0 : i32
    %c0_i32_1 = arith.constant 0 : i32
    return %c0_i32, %c0_i32_0 : i32, i32
  }
  func.func @transform_8(%arg0: i32) -> (i32, i32, i32) {
    %c0_i32 = arith.constant 0 : i32
    %c0_i32_0 = arith.constant 0 : i32
    %c0_i32_1 = arith.constant 0 : i32
    return %arg0, %c0_i32, %c0_i32_0 : i32, i32, i32
  }
}

</mosaic_0001>

<llo_original>
// kernel: sppf_mean_forward.1
$region0: #{sppf_mean_forward.1}
  #allocation0 [shape = 'u32[]', space=smem, size = 0x4, offset = 0x4, fixed_abs, tag = 'smem constant byte address 0x4 - core index']
  #allocation1 [shape = 'u32[144,128]{1,0:T(1,128)}', space=vmem, size = 0x12000, scoped, tag = 'internal scratch']
  %s0 = inlined_call_operand.vmem [shape: f32[2,8,256], index: 0, kind: input, shape index: {}]
  %s1 = inlined_call_operand.vmem [shape: bf16[8,8], index: 1, kind: input, shape index: {}]
  %s2 = inlined_call_operand.vmem [shape: f32[8,1], index: 2, kind: input, shape index: {}]
  %s3 = inlined_call_operand.vmem [shape: f32[8,1], index: 3, kind: input, shape index: {}]
  %s4 = inlined_call_operand.vmem [shape: f32[8,256], index: 4, kind: input, shape index: {}]
  %s5 = inlined_call_operand.vmem [shape: bf16[4,8,8], index: 5, kind: input, shape index: {}]
  %s6 = inlined_call_operand.vmem [shape: f32[8,1], index: 6, kind: input, shape index: {}]
  %s7 = inlined_call_operand.vmem [shape: f32[8,1], index: 7, kind: input, shape index: {}]
  %s8 = inlined_call_operand.vmem [shape: f32[2,8,256], index: 8, kind: output, shape index: {}]
  %s9 = sld [smem:[#allocation0]]
  $region65: #{sppf_mean_forward.1} parent=0
    _
  %s11 = ssub.s32 1, %s9
  %s12 = scalar_select 0, %s11, %s9
  loop: start=0, step=1, limit=4
  $region2: #{sppf_mean_forward.1} parent=0 // loop_pre_header
    _
  $region3: #{sppf_mean_forward.1} parent=0 // loop_header
    %s14 = sphi 0, %s18
    %p15 = scmp.ge.s32.totalorder %s14, 4
    %s24 = sphi 0, %s26
    %s27 = sphi 0, %s24
    %s28 = sphi 0, %s27
    %s44 = sphi 0, %s28
    %s48 = sphi 0, %s48
    %s50 = sphi 0, %s48
    %s51 = sphi 0, %s50
    %s65 = sphi 0, %s51
    %s69 = sphi 0, %s69
    %s71 = sphi 0, %s69
    %s72 = sphi 0, %s71
    %s86 = sphi 0, %s72
    %s90 = sphi 0, %s90
    %s92 = sphi 0, %s90
    %s93 = sphi 0, %s92
    %s107 = sphi 0, %s93
    %s111 = sphi 0, %s111
    %s113 = sphi 0, %s111
    %s114 = sphi 0, %s113
    %s128 = sphi 0, %s114
    %s132 = sphi 0, %s132
    %s134 = sphi 0, %s132
    %s135 = sphi 0, %s134
    %s149 = sphi 0, %s135
    %s153 = sphi 0, %s153
    %s155 = sphi 0, %s153
    %s156 = sphi 0, %s155
    %s170 = sphi 0, %s156
    %s174 = sphi 0, %s174
    %s176 = sphi 0, %s174
    %s177 = sphi 0, %s176
    %s191 = sphi 0, %s177
    %s197 = sphi 0, %s199
    %s200 = sphi 0, %s197
    %s201 = sphi 0, %s200
    %s217 = sphi 0, %s201
  $region4: #{sppf_mean_forward.1} parent=0 // loop_header_branch
    %17 = sbr.rel (%p15) target = $region8
  $region5: #{sppf_mean_forward.1} parent=0 // loop_body
    %s19 = ssub.s32 %s14, 1
    %s20 = ssub.s32 %s14, 2
    %s21 = sadd.s32 %s14, 1
    %s22 = ssub.s32 %s14, %s21
    %p23 = scmp.eq.s32.totalorder %s22, 0
    %s25 = sadd.s32 %s24, 1
    %s26 = scalar_select %p23, %s24, %s25
    %p29 = pneg %p23
    %p30 = scmp.eq.s32.totalorder %s14, 1
    %p31 = por %p29, %p30
    %p32 = scmp.ne.s32.totalorder %s24, %s27
    %p33 = scmp.eq.s32.totalorder %s14, 0
    %p34 = por %p32, %p33
    %p35 = scmp.ne.s32.totalorder %s24, %s27
    %p36 = scmp.eq.s32.totalorder %s19, 1
    %p37 = por %p35, %p36
    %p38 = scmp.ne.s32.totalorder %s27, %s28
    %p39 = scmp.eq.s32.totalorder %s19, 0
    %p40 = por %p38, %p39
    %p41 = scmp.ne.s32.totalorder %s27, %s28
    %p42 = scmp.eq.s32.totalorder %s20, 1
    %p43 = por %p41, %p42
    %p45 = scmp.ne.s32.totalorder %s28, %s44
    %p46 = scmp.eq.s32.totalorder %s20, 0
    %p47 = por %p45, %p46
    %s49 = sadd.s32 %s48, 1
    %p52 = scmp.eq.s32.totalorder %s14, 1
    %p53 = scmp.ne.s32.totalorder %s48, %s50
    %p54 = scmp.eq.s32.totalorder %s14, 0
    %p55 = por %p53, %p54
    %p56 = scmp.ne.s32.totalorder %s48, %s50
    %p57 = scmp.eq.s32.totalorder %s19, 1
    %p58 = por %p56, %p57
    %p59 = scmp.ne.s32.totalorder %s50, %s51
    %p60 = scmp.eq.s32.totalorder %s19, 0
    %p61 = por %p59, %p60
    %p62 = scmp.ne.s32.totalorder %s50, %s51
    %p63 = scmp.eq.s32.totalorder %s20, 1
    %p64 = por %p62, %p63
    %p66 = scmp.ne.s32.totalorder %s51, %s65
    %p67 = scmp.eq.s32.totalorder %s20, 0
    %p68 = por %p66, %p67
    %s70 = sadd.s32 %s69, 1
    %p73 = scmp.eq.s32.totalorder %s14, 1
    %p74 = scmp.ne.s32.totalorder %s69, %s71
    %p75 = scmp.eq.s32.totalorder %s14, 0
    %p76 = por %p74, %p75
    %p77 = scmp.ne.s32.totalorder %s69, %s71
    %p78 = scmp.eq.s32.totalorder %s19, 1
    %p79 = por %p77, %p78
    %p80 = scmp.ne.s32.totalorder %s71, %s72
    %p81 = scmp.eq.s32.totalorder %s19, 0
    %p82 = por %p80, %p81
    %p83 = scmp.ne.s32.totalorder %s71, %s72
    %p84 = scmp.eq.s32.totalorder %s20, 1
    %p85 = por %p83, %p84
    %p87 = scmp.ne.s32.totalorder %s72, %s86
    %p88 = scmp.eq.s32.totalorder %s20, 0
    %p89 = por %p87, %p88
    %s91 = sadd.s32 %s90, 1
    %p94 = scmp.eq.s32.totalorder %s14, 1
    %p95 = scmp.ne.s32.totalorder %s90, %s92
    %p96 = scmp.eq.s32.totalorder %s14, 0
    %p97 = por %p95, %p96
    %p98 = scmp.ne.s32.totalorder %s90, %s92
    %p99 = scmp.eq.s32.totalorder %s19, 1
    %p100 = por %p98, %p99
    %p101 = scmp.ne.s32.totalorder %s92, %s93
    %p102 = scmp.eq.s32.totalorder %s19, 0
    %p103 = por %p101, %p102
    %p104 = scmp.ne.s32.totalorder %s92, %s93
    %p105 = scmp.eq.s32.totalorder %s20, 1
    %p106 = por %p104, %p105
    %p108 = scmp.ne.s32.totalorder %s93, %s107
    %p109 = scmp.eq.s32.totalorder %s20, 0
    %p110 = por %p108, %p109
    %s112 = sadd.s32 %s111, 1
    %p115 = scmp.eq.s32.totalorder %s14, 1
    %p116 = scmp.ne.s32.totalorder %s111, %s113
    %p117 = scmp.eq.s32.totalorder %s14, 0
    %p118 = por %p116, %p117
    %p119 = scmp.ne.s32.totalorder %s111, %s113
    %p120 = scmp.eq.s32.totalorder %s19, 1
    %p121 = por %p119, %p120
    %p122 = scmp.ne.s32.totalorder %s113, %s114
    %p123 = scmp.eq.s32.totalorder %s19, 0
    %p124 = por %p122, %p123
    %p125 = scmp.ne.s32.totalorder %s113, %s114
    %p126 = scmp.eq.s32.totalorder %s20, 1
    %p127 = por %p125, %p126
    %p129 = scmp.ne.s32.totalorder %s114, %s128
    %p130 = scmp.eq.s32.totalorder %s20, 0
    %p131 = por %p129, %p130
    %s133 = sadd.s32 %s132, 1
    %p136 = scmp.eq.s32.totalorder %s14, 1
    %p137 = scmp.ne.s32.totalorder %s132, %s134
    %p138 = scmp.eq.s32.totalorder %s14, 0
    %p139 = por %p137, %p138
    %p140 = scmp.ne.s32.totalorder %s132, %s134
    %p141 = scmp.eq.s32.totalorder %s19, 1
    %p142 = por %p140, %p141
    %p143 = scmp.ne.s32.totalorder %s134, %s135
    %p144 = scmp.eq.s32.totalorder %s19, 0
    %p145 = por %p143, %p144
    %p146 = scmp.ne.s32.totalorder %s134, %s135
    %p147 = scmp.eq.s32.totalorder %s20, 1
    %p148 = por %p146, %p147
    %p150 = scmp.ne.s32.totalorder %s135, %s149
    %p151 = scmp.eq.s32.totalorder %s20, 0
    %p152 = por %p150, %p151
    %s154 = sadd.s32 %s153, 1
    %p157 = scmp.eq.s32.totalorder %s14, 1
    %p158 = scmp.ne.s32.totalorder %s153, %s155
    %p159 = scmp.eq.s32.totalorder %s14, 0
    %p160 = por %p158, %p159
    %p161 = scmp.ne.s32.totalorder %s153, %s155
    %p162 = scmp.eq.s32.totalorder %s19, 1
    %p163 = por %p161, %p162
    %p164 = scmp.ne.s32.totalorder %s155, %s156
    %p165 = scmp.eq.s32.totalorder %s19, 0
    %p166 = por %p164, %p165
    %p167 = scmp.ne.s32.totalorder %s155, %s156
    %p168 = scmp.eq.s32.totalorder %s20, 1
    %p169 = por %p167, %p168
    %p171 = scmp.ne.s32.totalorder %s156, %s170
    %p172 = scmp.eq.s32.totalorder %s20, 0
    %p173 = por %p171, %p172
    %s175 = sadd.s32 %s174, 1
    %p178 = scmp.eq.s32.totalorder %s14, 1
    %p179 = scmp.ne.s32.totalorder %s174, %s176
    %p180 = scmp.eq.s32.totalorder %s14, 0
    %p181 = por %p179, %p180
    %p182 = scmp.ne.s32.totalorder %s174, %s176
    %p183 = scmp.eq.s32.totalorder %s19, 1
    %p184 = por %p182, %p183
    %p185 = scmp.ne.s32.totalorder %s176, %s177
    %p186 = scmp.eq.s32.totalorder %s19, 0
    %p187 = por %p185, %p186
    %p188 = scmp.ne.s32.totalorder %s176, %s177
    %p189 = scmp.eq.s32.totalorder %s20, 1
    %p190 = por %p188, %p189
    %p192 = scmp.ne.s32.totalorder %s177, %s191
    %p193 = scmp.eq.s32.totalorder %s20, 0
    %p194 = por %p192, %p193
    %s195 = ssub.s32 %s14, %s21
    %p196 = scmp.eq.s32.totalorder %s195, 0
    %s198 = sadd.s32 %s197, 1
    %s199 = scalar_select %p196, %s197, %s198
    %p202 = pneg %p196
    %p203 = scmp.eq.s32.totalorder %s14, 1
    %p204 = por %p202, %p203
    %p205 = scmp.ne.s32.totalorder %s197, %s200
    %p206 = scmp.eq.s32.totalorder %s14, 0
    %p207 = por %p205, %p206
    %p208 = scmp.ne.s32.totalorder %s197, %s200
    %p209 = scmp.eq.s32.totalorder %s19, 1
    %p210 = por %p208, %p209
    %p211 = scmp.ne.s32.totalorder %s200, %s201
    %p212 = scmp.eq.s32.totalorder %s19, 0
    %p213 = por %p211, %p212
    %p214 = scmp.ne.s32.totalorder %s200, %s201
    %p215 = scmp.eq.s32.totalorder %s20, 1
    %p216 = por %p214, %p215
    %p218 = scmp.ne.s32.totalorder %s201, %s217
    %p219 = scmp.eq.s32.totalorder %s20, 0
    %p220 = por %p218, %p219
    %p221 = scmp.le.s32.totalorder 1, %s14
    %p222 = scmp.lt.s32.totalorder %s14, 3
    %p223 = pnand %p221, %p222
    %p224 = pneg %p223
    // Predicated region
    $region9: #{sppf_mean_forward.1} parent=5 // pred_check
      _
    $region10: #{sppf_mean_forward.1} parent=5 // pred_check_branch
      %226 = sbr.rel (%p223) target = $region12
    $region11: #{sppf_mean_forward.1} parent=5 // pred_region
      %s227 = ssub.s32 %s14, 1
      // Predicated region
      $region13: #{sppf_mean_forward.1} parent=11 // pred_check
        %p228 = pneg %p61
      $region14: #{sppf_mean_forward.1} parent=11 // pred_check_branch
        %230 = sbr.rel (%p228) target = $region16
      $region15: #{sppf_mean_forward.1} parent=11 // pred_region
        _
      $region16: #{sppf_mean_forward.1} parent=11 // pred_fallthru
        _
      // Predicated region
      $region17: #{sppf_mean_forward.1} parent=11 // pred_check
        %p231 = pneg %p82
      $region18: #{sppf_mean_forward.1} parent=11 // pred_check_branch
        %233 = sbr.rel (%p231) target = $region20
      $region19: #{sppf_mean_forward.1} parent=11 // pred_region
        _
      $region20: #{sppf_mean_forward.1} parent=11 // pred_fallthru
        _
      // Predicated region
      $region21: #{sppf_mean_forward.1} parent=11 // pred_check
        %p234 = pneg %p103
      $region22: #{sppf_mean_forward.1} parent=11 // pred_check_branch
        %236 = sbr.rel (%p234) target = $region24
      $region23: #{sppf_mean_forward.1} parent=11 // pred_region
        _
      $region24: #{sppf_mean_forward.1} parent=11 // pred_fallthru
        _
      // Predicated region
      $region25: #{sppf_mean_forward.1} parent=11 // pred_check
        %p237 = pneg %p124
      $region26: #{sppf_mean_forward.1} parent=11 // pred_check_branch
        %239 = sbr.rel (%p237) target = $region28
      $region27: #{sppf_mean_forward.1} parent=11 // pred_region
        _
      $region28: #{sppf_mean_forward.1} parent=11 // pred_fallthru
        _
      // Predicated region
      $region29: #{sppf_mean_forward.1} parent=11 // pred_check
        %p240 = pneg %p145
      $region30: #{sppf_mean_forward.1} parent=11 // pred_check_branch
        %242 = sbr.rel (%p240) target = $region32
      $region31: #{sppf_mean_forward.1} parent=11 // pred_region
        _
      $region32: #{sppf_mean_forward.1} parent=11 // pred_fallthru
        _
      // Predicated region
      $region33: #{sppf_mean_forward.1} parent=11 // pred_check
        %p243 = pneg %p166
      $region34: #{sppf_mean_forward.1} parent=11 // pred_check_branch
        %245 = sbr.rel (%p243) target = $region36
      $region35: #{sppf_mean_forward.1} parent=11 // pred_region
        _
      $region36: #{sppf_mean_forward.1} parent=11 // pred_fallthru
        _
      // Predicated region
      $region37: #{sppf_mean_forward.1} parent=11 // pred_check
        %p246 = pneg %p187
      $region38: #{sppf_mean_forward.1} parent=11 // pred_check_branch
        %248 = sbr.rel (%p246) target = $region40
      $region39: #{sppf_mean_forward.1} parent=11 // pred_region
        _
      $region40: #{sppf_mean_forward.1} parent=11 // pred_fallthru
        _
    $region12: #{sppf_mean_forward.1} parent=5 // pred_fallthru
      _
    %p249 = scmp.lt.s32.totalorder %s14, 2
    // Predicated region
    $region41: #{sppf_mean_forward.1} parent=5 // pred_check
      %p250 = pneg %p249
    $region42: #{sppf_mean_forward.1} parent=5 // pred_check_branch
      %252 = sbr.rel (%p250) target = $region44
    $region43: #{sppf_mean_forward.1} parent=5 // pred_region
      // Predicated region
      $region45: #{sppf_mean_forward.1} parent=43 // pred_check
        %p253 = pneg %p34
      $region46: #{sppf_mean_forward.1} parent=43 // pred_check_branch
        %255 = sbr.rel (%p253) target = $region48
      $region47: #{sppf_mean_forward.1} parent=43 // pred_region
        %p256 = scmp.lt.s32.totalorder %s14, 1
        %s257 = scalar_select %p256, %s14, 1
        %s258 = smul.addr %s257, 2
        %s259 = smul.addr %s258, 8
        %s260 = scalar_lea.vmem %s0, %s259
      $region48: #{sppf_mean_forward.1} parent=43 // pred_fallthru
        _
    $region44: #{sppf_mean_forward.1} parent=5 // pred_fallthru
      _
    %p261 = scmp.le.s32.totalorder 1, %s14
    %p262 = scmp.lt.s32.totalorder %s14, 3
    %p263 = pnand %p261, %p262
    %p264 = pneg %p263
    // Predicated region
    $region49: #{sppf_mean_forward.1} parent=5 // pred_check
      _
    $region50: #{sppf_mean_forward.1} parent=5 // pred_check_branch
      %266 = sbr.rel (%p263) target = $region52
    $region51: #{sppf_mean_forward.1} parent=5 // pred_region
      %s267 = ssub.s32 %s14, 1
      %p268 = scmp.lt.s32.totalorder %s19, 1
      %s269 = scalar_select %p268, %s19, 1
      %s270 = smul.addr %s269, 2
      %s271 = smul.addr %s270, 8
      %s272 = scalar_lea.vmem %s0, %s271
      %p273 = pneg %p40
      %p274 = pneg %p37
      %p275 = pneg %p61
      %p276 = pneg %p58
      %p277 = pneg %p82
      %p278 = pneg %p79
      %p279 = pneg %p103
      %p280 = pneg %p100
      %p281 = pneg %p124
      %p282 = pneg %p121
      %p283 = pneg %p145
      %p284 = pneg %p142
      %p285 = pneg %p166
      %p286 = pneg %p163
      %p287 = pneg %p187
      %p288 = pneg %p184
      %p289 = pneg %p213
      %p290 = pneg %p210
      %p291 = scmp.lt.s32.totalorder %s19, 1
      %s292 = scalar_select %p291, %s19, 1
      %s293 = smul.addr %s292, 2
      %s294 = smul.addr %s293, 8
      %s295 = scalar_lea.vmem %s8, %s294
      %p296 = scmp.lt.s32.totalorder %s19, 1
      %s297 = scalar_select %p296, %s19, 1
      %s298 = smul.addr %s297, 2
      %s299 = smul.addr %s298, 8
      %s300 = scalar_lea.vmem %s0, %s299
      %p301 = scmp.lt.s32.totalorder %s19, 1
      %s302 = scalar_select %p301, %s19, 1
      %s303 = smul.addr %s302, 2
      %s304 = smul.addr %s303, 8
      %s305 = scalar_lea.vmem %s8, %s304
      %v307 = vld [vmem:[%s300] sm:$0xff]
      %v308 = vld [vmem:[%s300 + $0x8] sm:$0xff]
      %v309 = vld [vmem:[%s1] sm:$0xf]
      %v310 = vpack.c.bf16 %v307, %v307
      %v311 = vpack.c.bf16 %v308, %v308
      %vm312 = vcmask 64512
      %v314 = vsel %vm312, %v309, 0
      %vm316 = vcmask 1043456
      %v318 = vsel %vm316, %v310, 0
      %v321 = vsel %vm316, %v311, 0
      %323 = vmatprep.subr.bf16.mxu0 %v321
      %324 = vmatpush1.bf16.msra.mxu0 %v318
      %325 = vmatprep.subr.bf16.mxu0 0
      %326 = vmatpush1.bf16.msra.mxu0 0
      %327 = vmatprep.subr.bf16.mxu0 0
      %328 = vmatpush1.bf16.msra.mxu0 0
      %329 = vmatprep.subr.bf16.mxu0 0
      %330 = vmatpush1.bf16.msra.mxu0 0
      %331 = vmatprep.subr.bf16.mxu0 0
      %332 = vmatpush1.bf16.msra.mxu0 0
      %333 = vmatprep.subr.bf16.mxu0 0
      %334 = vmatpush1.bf16.msra.mxu0 0
      %335 = vmatprep.subr.bf16.mxu0 0
      %336 = vmatpush1.bf16.msra.mxu0 0
      %337 = vmatprep.subr.bf16.mxu0 0
      %338 = vmatpush1.bf16.msra.mxu0 0
      %339 = vmatprep.subr.bf16.mxu0 0
      %340 = vmatpush1.bf16.msra.mxu0 0
      %341 = vmatprep.subr.bf16.mxu0 0
      %342 = vmatpush1.bf16.msra.mxu0 0
      %343 = vmatprep.subr.bf16.mxu0 0
      %344 = vmatpush1.bf16.msra.mxu0 0
      %345 = vmatprep.subr.bf16.mxu0 0
      %346 = vmatpush1.bf16.msra.mxu0 0
      %347 = vmatprep.subr.bf16.mxu0 0
      %348 = vmatpush1.bf16.msra.mxu0 0
      %349 = vmatprep.subr.bf16.mxu0 0
      %350 = vmatpush1.bf16.msra.mxu0 0
      %351 = vmatprep.subr.bf16.mxu0 0
      %352 = vmatpush1.bf16.msra.mxu0 0
      %353 = vmatprep.subr.bf16.mxu0 0
      %354 = vmatpush1.bf16.msra.mxu0 0
      %355 = vmatprep.mubr.bf16.mxu0 0
      %356 = vmatmul.mubr.bf16.gmra.mrb[0].mxu0 %v314
      %v357 = vpop.f32.mrb[0].mxu0
      %v358 = vadd.f32 0.0, %v357
      %v359 = vpop.f32.mrb[0].mxu0
      %v360 = vadd.f32 0.0, %v359
      %v361 = vpop.f32.mrb[0].mxu0
      %v362 = vpop.f32.mrb[0].mxu0
      %363 = vdwg.mxu0
      %v364 = vld [vmem:[%s2] sm:$0xff]
      %v365 = vld [vmem:[%s3] sm:$0xff]
      %v366 = vadd.f32 %v358, %v360
      %367 = vadd.xlane.f32.xlu0 %v366
      %v368 = vpop.xlane.xlu0 %367
      %v369 = vrcp.pop 256.0
      %v370 = vmul.f32 %v368, %v369
      %v371 = vsub.f32 %v358, %v370
      %v372 = vsub.f32 %v360, %v370
      %v373 = vmul.f32 %v371, %v371
      %v374 = vmul.f32 %v372, %v372
      %v375 = vadd.f32 %v373, %v374
      %376 = vadd.xlane.f32.xlu0 %v375
      %v377 = vpop.xlane.xlu0 %376
      %v378 = vmul.f32 %v377, %v369
      %v379 = vadd.f32 %v378, 1e-05
      %v380 = vrsqrt.pop %v379
      %v381 = vmul.f32 %v371, %v380
      %v382 = vmul.f32 %v372, %v380
      %384 = vset.pattern.permute.xlu0 0
      %385 = vperm.xlu0 %384, %v364
      %v386 = vpop.permute.xlu0 %385
      %v388 = vmul.f32 %v381, %v386
      %v389 = vmul.f32 %v382, %v386
      %391 = vset.pattern.permute.xlu0 0
      %392 = vperm.xlu0 %391, %v365
      %v393 = vpop.permute.xlu0 %392
      %v395 = vadd.f32 %v388, %v393
      %v396 = vadd.f32 %v389, %v393
      %v397 = vtanh.pop %v395
      %v398 = vtanh.pop %v396
      %v399 = vld [vmem:[%s4] sm:$0xff]
      %v400 = vld [vmem:[%s4 + $0x8] sm:$0xff]
      %401 = vrot.lane.b32.xlu0 %v399, 1
      %v402 = vpop.permute.xlu0 %401
      %403 = vrot.lane.b32.xlu0 %v400, 1
      %v404 = vpop.permute.xlu0 %403
      %v405 = vlaneseq
      %v406 = vand.u32 %v405, 127
      %vm407 = vcmp.lt.s32.totalorder %v406, 1
      %v408 = vsel %vm407, %v402, %v404
      %v409 = vsel %vm407, %v404, %v402
      %v410 = vsub.f32 %v409, %v399
      %v411 = vsub.f32 %v408, %v400
      %v412 = vand.u32 2147483647, %v410
      %v413 = vand.u32 2147483647, %v411
      %vm414 = vcmp.lt.f32.partialorder %v412, 0.5
      %vm415 = vcmp.lt.f32.partialorder %v413, 0.5
      %416 = vrot.lane.b32.xlu0 %v399, 2
      %v417 = vpop.permute.xlu0 %416
      %418 = vrot.lane.b32.xlu0 %v400, 2
      %v419 = vpop.permute.xlu0 %418
      %vm420 = vcmp.lt.s32.totalorder %v406, 2
      %v421 = vsel %vm420, %v417, %v419
      %v422 = vsel %vm420, %v419, %v417
      %v423 = vsub.f32 %v422, %v399
      %v424 = vsub.f32 %v421, %v400
      %v425 = vand.u32 2147483647, %v423
      %v426 = vand.u32 2147483647, %v424
      %vm427 = vcmp.lt.f32.partialorder %v425, 0.5
      %vm428 = vcmp.lt.f32.partialorder %v426, 0.5
      %429 = vrot.lane.b32.xlu0 %v399, 127
      %v430 = vpop.permute.xlu0 %429
      %431 = vrot.lane.b32.xlu0 %v400, 127
      %v432 = vpop.permute.xlu0 %431
      %vm433 = vcmp.lt.s32.totalorder %v406, 127
      %v434 = vsel %vm433, %v430, %v432
      %v435 = vsel %vm433, %v432, %v430
      %v436 = vsub.f32 %v434, %v399
      %v437 = vsub.f32 %v435, %v400
      %v438 = vand.u32 2147483647, %v436
      %v439 = vand.u32 2147483647, %v437
      %vm440 = vcmp.lt.f32.partialorder %v438, 0.5
      %vm441 = vcmp.lt.f32.partialorder %v439, 0.5
      %442 = vrot.lane.b32.xlu0 %v399, 126
      %v443 = vpop.permute.xlu0 %442
      %444 = vrot.lane.b32.xlu0 %v400, 126
      %v445 = vpop.permute.xlu0 %444
      %vm446 = vcmp.lt.s32.totalorder %v406, 126
      %v447 = vsel %vm446, %v443, %v445
      %v448 = vsel %vm446, %v445, %v443
      %v449 = vsub.f32 %v447, %v399
      %v450 = vsub.f32 %v448, %v400
      %v451 = vand.u32 2147483647, %v449
      %v452 = vand.u32 2147483647, %v450
      %vm453 = vcmp.lt.f32.partialorder %v451, 0.5
      %vm454 = vcmp.lt.f32.partialorder %v452, 0.5
      %455 = vrot.lane.b32.xlu0 %v399, 16
      %v456 = vpop.permute.xlu0 %455
      %457 = vrot.lane.b32.xlu0 %v400, 16
      %v458 = vpop.permute.xlu0 %457
      %vm459 = vcmp.lt.s32.totalorder %v406, 16
      %v460 = vsel %vm459, %v456, %v458
      %v461 = vsel %vm459, %v458, %v456
      %v462 = vsub.f32 %v461, %v399
      %v463 = vsub.f32 %v460, %v400
      %v464 = vand.u32 2147483647, %v462
      %v465 = vand.u32 2147483647, %v463
      %vm466 = vcmp.lt.f32.partialorder %v464, 2.5
      %vm467 = vcmp.lt.f32.partialorder %v465, 2.5
      %468 = vrot.lane.b32.xlu0 %v399, 32
      %v469 = vpop.permute.xlu0 %468
      %470 = vrot.lane.b32.xlu0 %v400, 32
      %v471 = vpop.permute.xlu0 %470
      %vm472 = vcmp.lt.s32.totalorder %v406, 32
      %v473 = vsel %vm472, %v469, %v471
      %v474 = vsel %vm472, %v471, %v469
      %v475 = vsub.f32 %v474, %v399
      %v476 = vsub.f32 %v473, %v400
      %v477 = vand.u32 2147483647, %v475
      %v478 = vand.u32 2147483647, %v476
      %vm479 = vcmp.lt.f32.partialorder %v477, 2.5
      %vm480 = vcmp.lt.f32.partialorder %v478, 2.5
      %481 = vrot.lane.b32.xlu0 %v399, 112
      %v482 = vpop.permute.xlu0 %481
      %483 = vrot.lane.b32.xlu0 %v400, 112
      %v484 = vpop.permute.xlu0 %483
      %vm485 = vcmp.lt.s32.totalorder %v406, 112
      %v486 = vsel %vm485, %v482, %v484
      %v487 = vsel %vm485, %v484, %v482
      %v488 = vsub.f32 %v486, %v399
      %v489 = vsub.f32 %v487, %v400
      %v490 = vand.u32 2147483647, %v488
      %v491 = vand.u32 2147483647, %v489
      %vm492 = vcmp.lt.f32.partialorder %v490, 2.5
      %vm493 = vcmp.lt.f32.partialorder %v491, 2.5
      %494 = vrot.lane.b32.xlu0 %v399, 96
      %v495 = vpop.permute.xlu0 %494
      %496 = vrot.lane.b32.xlu0 %v400, 96
      %v497 = vpop.permute.xlu0 %496
      %vm498 = vcmp.lt.s32.totalorder %v406, 96
      %v499 = vsel %vm498, %v495, %v497
      %v500 = vsel %vm498, %v497, %v495
      %v501 = vsub.f32 %v499, %v399
      %v502 = vsub.f32 %v500, %v400
      %v503 = vand.u32 2147483647, %v501
      %v504 = vand.u32 2147483647, %v502
      %vm505 = vcmp.lt.f32.partialorder %v503, 2.5
      %vm506 = vcmp.lt.f32.partialorder %v504, 2.5
      %507 = vrot.lane.b32.xlu0 %v397, 1
      %v508 = vpop.permute.xlu0 %507
      %509 = vrot.lane.b32.xlu0 %v398, 1
      %v510 = vpop.permute.xlu0 %509
      %v511 = vsel %vm407, %v508, %v510
      %v512 = vsel %vm407, %v510, %v508
      %v513 = vsel %vm414, %v512, 0.0
      %v514 = vsel %vm415, %v511, 0.0
      %v515 = vadd.f32 %v397, %v513
      %v516 = vadd.f32 %v398, %v514
      %517 = vrot.lane.b32.xlu0 %v397, 2
      %v518 = vpop.permute.xlu0 %517
      %519 = vrot.lane.b32.xlu0 %v398, 2
      %v520 = vpop.permute.xlu0 %519
      %v521 = vsel %vm420, %v518, %v520
      %v522 = vsel %vm420, %v520, %v518
      %v523 = vsel %vm427, %v522, 0.0
      %v524 = vsel %vm428, %v521, 0.0
      %v525 = vadd.f32 %v515, %v523
      %v526 = vadd.f32 %v516, %v524
      %527 = vrot.lane.b32.xlu0 %v397, 127
      %v528 = vpop.permute.xlu0 %527
      %529 = vrot.lane.b32.xlu0 %v398, 127
      %v530 = vpop.permute.xlu0 %529
      %v531 = vsel %vm433, %v528, %v530
      %v532 = vsel %vm433, %v530, %v528
      %v533 = vsel %vm440, %v531, 0.0
      %v534 = vsel %vm441, %v532, 0.0
      %v535 = vadd.f32 %v525, %v533
      %v536 = vadd.f32 %v526, %v534
      %537 = vrot.lane.b32.xlu0 %v397, 126
      %v538 = vpop.permute.xlu0 %537
      %539 = vrot.lane.b32.xlu0 %v398, 126
      %v540 = vpop.permute.xlu0 %539
      %v541 = vsel %vm446, %v538, %v540
      %v542 = vsel %vm446, %v540, %v538
      %v543 = vsel %vm453, %v541, 0.0
      %v544 = vsel %vm454, %v542, 0.0
      %v545 = vadd.f32 %v535, %v543
      %v546 = vadd.f32 %v536, %v544
      %v547 = vmul.f32 %v545, 0.2
      %v548 = vmul.f32 %v546, 0.2
      %549 = vrot.lane.b32.xlu0 %v547, 16
      %v550 = vpop.permute.xlu0 %549
      %551 = vrot.lane.b32.xlu0 %v548, 16
      %v552 = vpop.permute.xlu0 %551
      %v553 = vsel %vm459, %v550, %v552
      %v554 = vsel %vm459, %v552, %v550
      %v555 = vsel %vm466, %v554, 0.0
      %v556 = vsel %vm467, %v553, 0.0
      %v557 = vadd.f32 %v547, %v555
      %v558 = vadd.f32 %v548, %v556
      %559 = vrot.lane.b32.xlu0 %v547, 32
      %v560 = vpop.permute.xlu0 %559
      %561 = vrot.lane.b32.xlu0 %v548, 32
      %v562 = vpop.permute.xlu0 %561
      %v563 = vsel %vm472, %v560, %v562
      %v564 = vsel %vm472, %v562, %v560
      %v565 = vsel %vm479, %v564, 0.0
      %v566 = vsel %vm480, %v563, 0.0
      %v567 = vadd.f32 %v557, %v565
      %v568 = vadd.f32 %v558, %v566
      %569 = vrot.lane.b32.xlu0 %v547, 112
      %v570 = vpop.permute.xlu0 %569
      %571 = vrot.lane.b32.xlu0 %v548, 112
      %v572 = vpop.permute.xlu0 %571
      %v573 = vsel %vm485, %v570, %v572
      %v574 = vsel %vm485, %v572, %v570
      %v575 = vsel %vm492, %v573, 0.0
      %v576 = vsel %vm493, %v574, 0.0
      %v577 = vadd.f32 %v567, %v575
      %v578 = vadd.f32 %v568, %v576
      %579 = vrot.lane.b32.xlu0 %v547, 96
      %v580 = vpop.permute.xlu0 %579
      %581 = vrot.lane.b32.xlu0 %v548, 96
      %v582 = vpop.permute.xlu0 %581
      %v583 = vsel %vm498, %v580, %v582
      %v584 = vsel %vm498, %v582, %v580
      %v585 = vsel %vm505, %v583, 0.0
      %v586 = vsel %vm506, %v584, 0.0
      %v587 = vadd.f32 %v577, %v585
      %v588 = vadd.f32 %v578, %v586
      %v589 = vmul.f32 %v587, 0.2
      %v590 = vmul.f32 %v588, 0.2
      %591 = vrot.lane.b32.xlu0 %v589, 1
      %v592 = vpop.permute.xlu0 %591
      %593 = vrot.lane.b32.xlu0 %v590, 1
      %v594 = vpop.permute.xlu0 %593
      %v595 = vsel %vm407, %v592, %v594
      %v596 = vsel %vm407, %v594, %v592
      %v597 = vsel %vm414, %v596, 0.0
      %v598 = vsel %vm415, %v595, 0.0
      %v599 = vadd.f32 %v589, %v597
      %v600 = vadd.f32 %v590, %v598
      %601 = vrot.lane.b32.xlu0 %v589, 2
      %v602 = vpop.permute.xlu0 %601
      %603 = vrot.lane.b32.xlu0 %v590, 2
      %v604 = vpop.permute.xlu0 %603
      %v605 = vsel %vm420, %v602, %v604
      %v606 = vsel %vm420, %v604, %v602
      %v607 = vsel %vm427, %v606, 0.0
      %v608 = vsel %vm428, %v605, 0.0
      %v609 = vadd.f32 %v599, %v607
      %v610 = vadd.f32 %v600, %v608
      %611 = vrot.lane.b32.xlu0 %v589, 127
      %v612 = vpop.permute.xlu0 %611
      %613 = vrot.lane.b32.xlu0 %v590, 127
      %v614 = vpop.permute.xlu0 %613
      %v615 = vsel %vm433, %v612, %v614
      %v616 = vsel %vm433, %v614, %v612
      %v617 = vsel %vm440, %v615, 0.0
      %v618 = vsel %vm441, %v616, 0.0
      %v619 = vadd.f32 %v609, %v617
      %v620 = vadd.f32 %v610, %v618
      %621 = vrot.lane.b32.xlu0 %v589, 126
      %v622 = vpop.permute.xlu0 %621
      %623 = vrot.lane.b32.xlu0 %v590, 126
      %v624 = vpop.permute.xlu0 %623
      %v625 = vsel %vm446, %v622, %v624
      %v626 = vsel %vm446, %v624, %v622
      %v627 = vsel %vm453, %v625, 0.0
      %v628 = vsel %vm454, %v626, 0.0
      %v629 = vadd.f32 %v619, %v627
      %v630 = vadd.f32 %v620, %v628
      %v631 = vmul.f32 %v629, 0.2
      %v632 = vmul.f32 %v630, 0.2
      %633 = vrot.lane.b32.xlu0 %v631, 16
      %v634 = vpop.permute.xlu0 %633
      %635 = vrot.lane.b32.xlu0 %v632, 16
      %v636 = vpop.permute.xlu0 %635
      %v637 = vsel %vm459, %v634, %v636
      %v638 = vsel %vm459, %v636, %v634
      %v639 = vsel %vm466, %v638, 0.0
      %v640 = vsel %vm467, %v637, 0.0
      %v641 = vadd.f32 %v631, %v639
      %v642 = vadd.f32 %v632, %v640
      %643 = vrot.lane.b32.xlu0 %v631, 32
      %v644 = vpop.permute.xlu0 %643
      %645 = vrot.lane.b32.xlu0 %v632, 32
      %v646 = vpop.permute.xlu0 %645
      %v647 = vsel %vm472, %v644, %v646
      %v648 = vsel %vm472, %v646, %v644
      %v649 = vsel %vm479, %v648, 0.0
      %v650 = vsel %vm480, %v647, 0.0
      %v651 = vadd.f32 %v641, %v649
      %v652 = vadd.f32 %v642, %v650
      %653 = vrot.lane.b32.xlu0 %v631, 112
      %v654 = vpop.permute.xlu0 %653
      %655 = vrot.lane.b32.xlu0 %v632, 112
      %v656 = vpop.permute.xlu0 %655
      %v657 = vsel %vm485, %v654, %v656
      %v658 = vsel %vm485, %v656, %v654
      %v659 = vsel %vm492, %v657, 0.0
      %v660 = vsel %vm493, %v658, 0.0
      %v661 = vadd.f32 %v651, %v659
      %v662 = vadd.f32 %v652, %v660
      %663 = vrot.lane.b32.xlu0 %v631, 96
      %v664 = vpop.permute.xlu0 %663
      %665 = vrot.lane.b32.xlu0 %v632, 96
      %v666 = vpop.permute.xlu0 %665
      %v667 = vsel %vm498, %v664, %v666
      %v668 = vsel %vm498, %v666, %v664
      %v669 = vsel %vm505, %v667, 0.0
      %v670 = vsel %vm506, %v668, 0.0
      %v671 = vadd.f32 %v661, %v669
      %v672 = vadd.f32 %v662, %v670
      %v673 = vmul.f32 %v671, 0.2
      %v674 = vmul.f32 %v672, 0.2
      %675 = vrot.lane.b32.xlu0 %v673, 1
      %v676 = vpop.permute.xlu0 %675
      %677 = vrot.lane.b32.xlu0 %v674, 1
      %v678 = vpop.permute.xlu0 %677
      %v679 = vsel %vm407, %v676, %v678
      %v680 = vsel %vm407, %v678, %v676
      %v681 = vsel %vm414, %v680, 0.0
      %v682 = vsel %vm415, %v679, 0.0
      %v683 = vadd.f32 %v673, %v681
      %v684 = vadd.f32 %v674, %v682
      %685 = vrot.lane.b32.xlu0 %v673, 2
      %v686 = vpop.permute.xlu0 %685
      %687 = vrot.lane.b32.xlu0 %v674, 2
      %v688 = vpop.permute.xlu0 %687
      %v689 = vsel %vm420, %v686, %v688
      %v690 = vsel %vm420, %v688, %v686
      %v691 = vsel %vm427, %v690, 0.0
      %v692 = vsel %vm428, %v689, 0.0
      %v693 = vadd.f32 %v683, %v691
      %v694 = vadd.f32 %v684, %v692
      %695 = vrot.lane.b32.xlu0 %v673, 127
      %v696 = vpop.permute.xlu0 %695
      %697 = vrot.lane.b32.xlu0 %v674, 127
      %v698 = vpop.permute.xlu0 %697
      %v699 = vsel %vm433, %v696, %v698
      %v700 = vsel %vm433, %v698, %v696
      %v701 = vsel %vm440, %v699, 0.0
      %v702 = vsel %vm441, %v700, 0.0
      %v703 = vadd.f32 %v693, %v701
      %v704 = vadd.f32 %v694, %v702
      %705 = vrot.lane.b32.xlu0 %v673, 126
      %v706 = vpop.permute.xlu0 %705
      %707 = vrot.lane.b32.xlu0 %v674, 126
      %v708 = vpop.permute.xlu0 %707
      %v709 = vsel %vm446, %v706, %v708
      %v710 = vsel %vm446, %v708, %v706
      %v711 = vsel %vm453, %v709, 0.0
      %v712 = vsel %vm454, %v710, 0.0
      %v713 = vadd.f32 %v703, %v711
      %v714 = vadd.f32 %v704, %v712
      %v715 = vmul.f32 %v713, 0.2
      %v716 = vmul.f32 %v714, 0.2
      %717 = vrot.lane.b32.xlu0 %v715, 16
      %v718 = vpop.permute.xlu0 %717
      %719 = vrot.lane.b32.xlu0 %v716, 16
      %v720 = vpop.permute.xlu0 %719
      %v721 = vsel %vm459, %v718, %v720
      %v722 = vsel %vm459, %v720, %v718
      %v723 = vsel %vm466, %v722, 0.0
      %v724 = vsel %vm467, %v721, 0.0
      %v725 = vadd.f32 %v715, %v723
      %v726 = vadd.f32 %v716, %v724
      %727 = vrot.lane.b32.xlu0 %v715, 32
      %v728 = vpop.permute.xlu0 %727
      %729 = vrot.lane.b32.xlu0 %v716, 32
      %v730 = vpop.permute.xlu0 %729
      %v731 = vsel %vm472, %v728, %v730
      %v732 = vsel %vm472, %v730, %v728
      %v733 = vsel %vm479, %v732, 0.0
      %v734 = vsel %vm480, %v731, 0.0
      %v735 = vadd.f32 %v725, %v733
      %v736 = vadd.f32 %v726, %v734
      %737 = vrot.lane.b32.xlu0 %v715, 112
      %v738 = vpop.permute.xlu0 %737
      %739 = vrot.lane.b32.xlu0 %v716, 112
      %v740 = vpop.permute.xlu0 %739
      %v741 = vsel %vm485, %v738, %v740
      %v742 = vsel %vm485, %v740, %v738
      %v743 = vsel %vm492, %v741, 0.0
      %v744 = vsel %vm493, %v742, 0.0
      %v745 = vadd.f32 %v735, %v743
      %v746 = vadd.f32 %v736, %v744
      %747 = vrot.lane.b32.xlu0 %v715, 96
      %v748 = vpop.permute.xlu0 %747
      %749 = vrot.lane.b32.xlu0 %v716, 96
      %v750 = vpop.permute.xlu0 %749
      %v751 = vsel %vm498, %v748, %v750
      %v752 = vsel %vm498, %v750, %v748
      %v753 = vsel %vm505, %v751, 0.0
      %v754 = vsel %vm506, %v752, 0.0
      %v755 = vadd.f32 %v745, %v753
      %v756 = vadd.f32 %v746, %v754
      %v757 = vmul.f32 %v755, 0.2
      %v758 = vmul.f32 %v756, 0.2
      %v759 = vld [vmem:[%s5] sm:$0xf]
      %v760 = vpack.c.bf16 %v397, %v397
      %v761 = vpack.c.bf16 %v398, %v398
      %s762 = scalar_lea.vmem %s5, 4
      %v763 = vld [vmem:[%s762] sm:$0xf]
      %v764 = vpack.c.bf16 %v589, %v589
      %v765 = vpack.c.bf16 %v590, %v590
      %v767 = vsel %vm312, %v763, 0
      %v770 = vsel %vm316, %v764, 0
      %v773 = vsel %vm316, %v765, 0
      %775 = vmatprep.subr.bf16.mxu0 %v773
      %776 = vmatpush1.bf16.msra.mxu0 %v770
      %777 = vmatprep.subr.bf16.mxu0 0
      %778 = vmatpush1.bf16.msra.mxu0 0
      %779 = vmatprep.subr.bf16.mxu0 0
      %780 = vmatpush1.bf16.msra.mxu0 0
      %781 = vmatprep.subr.bf16.mxu0 0
      %782 = vmatpush1.bf16.msra.mxu0 0
      %783 = vmatprep.subr.bf16.mxu0 0
      %784 = vmatpush1.bf16.msra.mxu0 0
      %785 = vmatprep.subr.bf16.mxu0 0
      %786 = vmatpush1.bf16.msra.mxu0 0
      %787 = vmatprep.subr.bf16.mxu0 0
      %788 = vmatpush1.bf16.msra.mxu0 0
      %789 = vmatprep.subr.bf16.mxu0 0
      %790 = vmatpush1.bf16.msra.mxu0 0
      %791 = vmatprep.subr.bf16.mxu0 0
      %792 = vmatpush1.bf16.msra.mxu0 0
      %793 = vmatprep.subr.bf16.mxu0 0
      %794 = vmatpush1.bf16.msra.mxu0 0
      %795 = vmatprep.subr.bf16.mxu0 0
      %796 = vmatpush1.bf16.msra.mxu0 0
      %797 = vmatprep.subr.bf16.mxu0 0
      %798 = vmatpush1.bf16.msra.mxu0 0
      %799 = vmatprep.subr.bf16.mxu0 0
      %800 = vmatpush1.bf16.msra.mxu0 0
      %801 = vmatprep.subr.bf16.mxu0 0
      %802 = vmatpush1.bf16.msra.mxu0 0
      %803 = vmatprep.subr.bf16.mxu0 0
      %804 = vmatpush1.bf16.msra.mxu0 0
      %805 = vmatprep.subr.bf16.mxu0 0
      %806 = vmatpush1.bf16.msra.mxu0 0
      %807 = vmatprep.mubr.bf16.mxu0 0
      %808 = vmatmul.mubr.bf16.gmra.mrb[0].mxu0 %v767
      %v809 = vpop.f32.mrb[0].mxu0
      %v810 = vadd.f32 0.0, %v809
      %v811 = vpop.f32.mrb[0].mxu0
      %v812 = vadd.f32 0.0, %v811
      %v813 = vpop.f32.mrb[0].mxu0
      %v814 = vpop.f32.mrb[0].mxu0
      %815 = vdwg.mxu0
      %v817 = vsel %vm312, %v759, 0
      %v820 = vsel %vm316, %v760, 0
      %v823 = vsel %vm316, %v761, 0
      %825 = vmatprep.subr.bf16.mxu0 %v823
      %826 = vmatpush1.bf16.msra.mxu0 %v820
      %827 = vmatprep.subr.bf16.mxu0 0
      %828 = vmatpush1.bf16.msra.mxu0 0
      %829 = vmatprep.subr.bf16.mxu0 0
      %830 = vmatpush1.bf16.msra.mxu0 0
      %831 = vmatprep.subr.bf16.mxu0 0
      %832 = vmatpush1.bf16.msra.mxu0 0
      %833 = vmatprep.subr.bf16.mxu0 0
      %834 = vmatpush1.bf16.msra.mxu0 0
      %835 = vmatprep.subr.bf16.mxu0 0
      %836 = vmatpush1.bf16.msra.mxu0 0
      %837 = vmatprep.subr.bf16.mxu0 0
      %838 = vmatpush1.bf16.msra.mxu0 0
      %839 = vmatprep.subr.bf16.mxu0 0
      %840 = vmatpush1.bf16.msra.mxu0 0
      %841 = vmatprep.subr.bf16.mxu0 0
      %842 = vmatpush1.bf16.msra.mxu0 0
      %843 = vmatprep.subr.bf16.mxu0 0
      %844 = vmatpush1.bf16.msra.mxu0 0
      %845 = vmatprep.subr.bf16.mxu0 0
      %846 = vmatpush1.bf16.msra.mxu0 0
      %847 = vmatprep.subr.bf16.mxu0 0
      %848 = vmatpush1.bf16.msra.mxu0 0
      %849 = vmatprep.subr.bf16.mxu0 0
      %850 = vmatpush1.bf16.msra.mxu0 0
      %851 = vmatprep.subr.bf16.mxu0 0
      %852 = vmatpush1.bf16.msra.mxu0 0
      %853 = vmatprep.subr.bf16.mxu0 0
      %854 = vmatpush1.bf16.msra.mxu0 0
      %855 = vmatprep.subr.bf16.mxu0 0
      %856 = vmatpush1.bf16.msra.mxu0 0
      %857 = vmatprep.mubr.bf16.mxu0 0
      %858 = vmatmul.mubr.bf16.gmra.mrb[0].mxu0 %v817
      %v859 = vpop.f32.mrb[0].mxu0
      %v860 = vadd.f32 %v810, %v859
      %v861 = vpop.f32.mrb[0].mxu0
      %v862 = vadd.f32 %v812, %v861
      %v863 = vpop.f32.mrb[0].mxu0
      %v864 = vpop.f32.mrb[0].mxu0
      %865 = vdwg.mxu0
      %s866 = scalar_lea.vmem %s5, 8
      %v867 = vld [vmem:[%s866] sm:$0xf]
      %v868 = vpack.c.bf16 %v673, %v673
      %v869 = vpack.c.bf16 %v674, %v674
      %v871 = vsel %vm312, %v867, 0
      %v874 = vsel %vm316, %v868, 0
      %v877 = vsel %vm316, %v869, 0
      %879 = vmatprep.subr.bf16.mxu0 %v877
      %880 = vmatpush1.bf16.msra.mxu0 %v874
      %881 = vmatprep.subr.bf16.mxu0 0
      %882 = vmatpush1.bf16.msra.mxu0 0
      %883 = vmatprep.subr.bf16.mxu0 0
      %884 = vmatpush1.bf16.msra.mxu0 0
      %885 = vmatprep.subr.bf16.mxu0 0
      %886 = vmatpush1.bf16.msra.mxu0 0
      %887 = vmatprep.subr.bf16.mxu0 0
      %888 = vmatpush1.bf16.msra.mxu0 0
      %889 = vmatprep.subr.bf16.mxu0 0
      %890 = vmatpush1.bf16.msra.mxu0 0
      %891 = vmatprep.subr.bf16.mxu0 0
      %892 = vmatpush1.bf16.msra.mxu0 0
      %893 = vmatprep.subr.bf16.mxu0 0
      %894 = vmatpush1.bf16.msra.mxu0 0
      %895 = vmatprep.subr.bf16.mxu0 0
      %896 = vmatpush1.bf16.msra.mxu0 0
      %897 = vmatprep.subr.bf16.mxu0 0
      %898 = vmatpush1.bf16.msra.mxu0 0
      %899 = vmatprep.subr.bf16.mxu0 0
      %900 = vmatpush1.bf16.msra.mxu0 0
      %901 = vmatprep.subr.bf16.mxu0 0
      %902 = vmatpush1.bf16.msra.mxu0 0
      %903 = vmatprep.subr.bf16.mxu0 0
      %904 = vmatpush1.bf16.msra.mxu0 0
      %905 = vmatprep.subr.bf16.mxu0 0
      %906 = vmatpush1.bf16.msra.mxu0 0
      %907 = vmatprep.subr.bf16.mxu0 0
      %908 = vmatpush1.bf16.msra.mxu0 0
      %909 = vmatprep.subr.bf16.mxu0 0
      %910 = vmatpush1.bf16.msra.mxu0 0
      %911 = vmatprep.mubr.bf16.mxu0 0
      %912 = vmatmul.mubr.bf16.gmra.mrb[0].mxu0 %v871
      %v913 = vpop.f32.mrb[0].mxu0
      %v914 = vadd.f32 0.0, %v913
      %v915 = vpop.f32.mrb[0].mxu0
      %v916 = vadd.f32 0.0, %v915
      %v917 = vpop.f32.mrb[0].mxu0
      %v918 = vpop.f32.mrb[0].mxu0
      %919 = vdwg.mxu0
      %v920 = vadd.f32 %v860, %v914
      %v921 = vadd.f32 %v862, %v916
      %s922 = scalar_lea.vmem %s5, 12
      %v923 = vld [vmem:[%s922] sm:$0xf]
      %v924 = vpack.c.bf16 %v757, %v757
      %v925 = vpack.c.bf16 %v758, %v758
      %v927 = vsel %vm312, %v923, 0
      %v930 = vsel %vm316, %v924, 0
      %v933 = vsel %vm316, %v925, 0
      %935 = vmatprep.subr.bf16.mxu0 %v933
      %936 = vmatpush1.bf16.msra.mxu0 %v930
      %937 = vmatprep.subr.bf16.mxu0 0
      %938 = vmatpush1.bf16.msra.mxu0 0
      %939 = vmatprep.subr.bf16.mxu0 0
      %940 = vmatpush1.bf16.msra.mxu0 0
      %941 = vmatprep.subr.bf16.mxu0 0
      %942 = vmatpush1.bf16.msra.mxu0 0
      %943 = vmatprep.subr.bf16.mxu0 0
      %944 = vmatpush1.bf16.msra.mxu0 0
      %945 = vmatprep.subr.bf16.mxu0 0
      %946 = vmatpush1.bf16.msra.mxu0 0
      %947 = vmatprep.subr.bf16.mxu0 0
      %948 = vmatpush1.bf16.msra.mxu0 0
      %949 = vmatprep.subr.bf16.mxu0 0
      %950 = vmatpush1.bf16.msra.mxu0 0
      %951 = vmatprep.subr.bf16.mxu0 0
      %952 = vmatpush1.bf16.msra.mxu0 0
      %953 = vmatprep.subr.bf16.mxu0 0
      %954 = vmatpush1.bf16.msra.mxu0 0
      %955 = vmatprep.subr.bf16.mxu0 0
      %956 = vmatpush1.bf16.msra.mxu0 0
      %957 = vmatprep.subr.bf16.mxu0 0
      %958 = vmatpush1.bf16.msra.mxu0 0
      %959 = vmatprep.subr.bf16.mxu0 0
      %960 = vmatpush1.bf16.msra.mxu0 0
      %961 = vmatprep.subr.bf16.mxu0 0
      %962 = vmatpush1.bf16.msra.mxu0 0
      %963 = vmatprep.subr.bf16.mxu0 0
      %964 = vmatpush1.bf16.msra.mxu0 0
      %965 = vmatprep.subr.bf16.mxu0 0
      %966 = vmatpush1.bf16.msra.mxu0 0
      %967 = vmatprep.mubr.bf16.mxu0 0
      %968 = vmatmul.mubr.bf16.gmra.mrb[0].mxu0 %v927
      %v969 = vpop.f32.mrb[0].mxu0
      %v970 = vadd.f32 0.0, %v969
      %v971 = vpop.f32.mrb[0].mxu0
      %v972 = vadd.f32 0.0, %v971
      %v973 = vpop.f32.mrb[0].mxu0
      %v974 = vpop.f32.mrb[0].mxu0
      %975 = vdwg.mxu0
      %v976 = vadd.f32 %v920, %v970
      %v977 = vadd.f32 %v921, %v972
      %v978 = vld [vmem:[%s6] sm:$0xff]
      %v979 = vld [vmem:[%s7] sm:$0xff]
      %v980 = vadd.f32 %v976, %v977
      %981 = vadd.xlane.f32.xlu0 %v980
      %v982 = vpop.xlane.xlu0 %981
      %v983 = vmul.f32 %v982, %v369
      %v984 = vsub.f32 %v976, %v983
      %v985 = vsub.f32 %v977, %v983
      %v986 = vmul.f32 %v984, %v984
      %v987 = vmul.f32 %v985, %v985
      %v988 = vadd.f32 %v986, %v987
      %989 = vadd.xlane.f32.xlu0 %v988
      %v990 = vpop.xlane.xlu0 %989
      %v991 = vmul.f32 %v990, %v369
      %v992 = vadd.f32 %v991, 1e-05
      %v993 = vrsqrt.pop %v992
      %v994 = vmul.f32 %v984, %v993
      %v995 = vmul.f32 %v985, %v993
      %997 = vset.pattern.permute.xlu0 0
      %998 = vperm.xlu0 %997, %v978
      %v999 = vpop.permute.xlu0 %998
      %v1001 = vmul.f32 %v994, %v999
      %v1002 = vmul.f32 %v995, %v999
      %1004 = vset.pattern.permute.xlu0 0
      %1005 = vperm.xlu0 %1004, %v979
      %v1006 = vpop.permute.xlu0 %1005
      %v1008 = vadd.f32 %v1001, %v1006
      %v1009 = vadd.f32 %v1002, %v1006
      %v1010 = vtanh.pop %v1008
      %v1011 = vtanh.pop %v1009
      %1012 = vst [vmem:[%s305] sm:$0xff] %v1010
      %1013 = vst [vmem:[%s305 + $0x8] sm:$0xff] %v1011
      %p1014 = scmp.lt.s32.totalorder %s19, 1
      %s1015 = scalar_select %p1014, %s19, 1
      %s1016 = smul.addr %s1015, 2
      %s1017 = smul.addr %s1016, 8
      %s1018 = scalar_lea.vmem %s8, %s1017
      // Predicated region
      $region53: #{sppf_mean_forward.1} parent=51 // pred_check
        %p1019 = pneg %p210
      $region54: #{sppf_mean_forward.1} parent=51 // pred_check_branch
        %1021 = sbr.rel (%p1019) target = $region56
      $region55: #{sppf_mean_forward.1} parent=51 // pred_region
        _
      $region56: #{sppf_mean_forward.1} parent=51 // pred_fallthru
        _
    $region52: #{sppf_mean_forward.1} parent=5 // pred_fallthru
      _
    %p1022 = scmp.le.s32.totalorder 2, %s14
    // Predicated region
    $region57: #{sppf_mean_forward.1} parent=5 // pred_check
      %p1023 = pneg %p1022
    $region58: #{sppf_mean_forward.1} parent=5 // pred_check_branch
      %1025 = sbr.rel (%p1023) target = $region60
    $region59: #{sppf_mean_forward.1} parent=5 // pred_region
      %s1026 = ssub.s32 %s14, 2
      // Predicated region
      $region61: #{sppf_mean_forward.1} parent=59 // pred_check
        %p1027 = pneg %p216
      $region62: #{sppf_mean_forward.1} parent=59 // pred_check_branch
        %1029 = sbr.rel (%p1027) target = $region64
      $region63: #{sppf_mean_forward.1} parent=59 // pred_region
        %p1030 = scmp.lt.s32.totalorder %s20, 1
        %s1031 = scalar_select %p1030, %s20, 1
        %s1032 = smul.addr %s1031, 2
        %s1033 = smul.addr %s1032, 8
        %s1034 = scalar_lea.vmem %s8, %s1033
      $region64: #{sppf_mean_forward.1} parent=59 // pred_fallthru
        _
    $region60: #{sppf_mean_forward.1} parent=5 // pred_fallthru
      _
  $region6: #{sppf_mean_forward.1} parent=0 // loop_footer
    %s18 = sadd.s32 1, %s14
  $region7: #{sppf_mean_forward.1} parent=0 // loop_footer_branch
    %13 = sbr.rel target = $region3
  $region8: #{sppf_mean_forward.1} parent=0 // loop_exit
    _

</llo_original>
